<compile_context>
chip_gen: v7x
topology: tpu7x:2x2x1
jax: 0.10.0
libtpu: 0.0.40
codegen_flags: <defaults>
</compile_context>

<pallas_src>
import functools

import jax
import jax.numpy as jnp
import numpy as np
from jax import lax
from jax.experimental import pallas as pl
from jax.experimental.pallas import tpu as pltpu


def _mhsa_kernel(x_ref, wqkv_t_ref, wo_ref, bqkv_ref, bo_ref, o_ref,
                 qkvT_ref, headsT_ref, *, num_heads, head_dim, n_valid,
                 q_tile, approx_recip):
    """One grid step == one batch element.

    x_ref:      (1, Np, D)   padded input tokens
    wqkv_t_ref: (3D, D)      fused (Q|K|V) projection, transposed; Q pre-scaled
    wo_ref:     (D, D)       out_proj weight, math convention (un-transposed)
    bqkv_ref:   (3D, 1)      fused bias column (f32), Q part pre-scaled
    bo_ref:     (1, D)       out_proj bias row (f32)
    o_ref:      (1, Np, D)   padded output
    qkvT_ref:   (3D, Np)     VMEM scratch: transposed qkv activations
    headsT_ref: (D, q_tile)  VMEM scratch: transposed head outputs for one q-tile
    """
    D = num_heads * head_dim
    n_pad = qkvT_ref.shape[1]
    x = x_ref[0]                                   # (Np, D), input dtype
    cdt = x.dtype

    # Fused QKV projection, transposed: qkv^T = Wqkv^T @ x^T (contraction on D).
    qkv_t = lax.dot_general(
        wqkv_t_ref[...], x,
        dimension_numbers=(((1,), (1,)), ((), ())),
        preferred_element_type=jnp.float32)                        # (3D, Np) f32
    qkvT_ref[...] = (qkv_t + bqkv_ref[...]).astype(cdt)

    # Static key-padding bias (column over keys), hoisted out of all loops.
    if n_valid < n_pad:
        key_ids = lax.broadcasted_iota(jnp.int32, (n_pad, 1), 0)
        key_bias = jnp.where(key_ids < n_valid,
                             jnp.float32(0.0), jnp.float32(-1e30))
    else:
        key_bias = None

    n_q_tiles = n_pad // q_tile

    def q_tile_body(qi, carry):
        qo = pl.multiple_of(qi * q_tile, 128)

        def head_body(h, c):
            row = h * head_dim
            if head_dim % 8 == 0:
                row = pl.multiple_of(row, 8)                       # sublane-aligned
            q_t = qkvT_ref[pl.ds(row, head_dim), pl.ds(qo, q_tile)]      # (hd, tq)
            k_t = qkvT_ref[pl.ds(D + row, head_dim), :]                  # (hd, Np)
            v_t = qkvT_ref[pl.ds(2 * D + row, head_dim), :]              # (hd, Np)

            # Scores with keys on sublanes / queries on lanes: (Np, tq).
            # Operand "transposes" live in the contraction dims (MXU push),
            # no separate vxpose traffic.  1/sqrt(hd) already folded into Q.
            s_t = lax.dot_general(
                k_t, q_t, dimension_numbers=(((0,), (0,)), ((), ())),
                preferred_element_type=jnp.float32)
            if key_bias is not None:
                s_t = s_t + key_bias                               # mask padded keys
            m = jnp.max(s_t, axis=0, keepdims=True)                # (1, tq) f32
            p_t = jnp.exp(s_t - m)                                 # (Np, tq) f32
            l = jnp.sum(p_t, axis=0, keepdims=True)                # (1, tq) f32

            # PV in natural MXU form: (hd, Np) @ (Np, tq) -> (hd, tq).
            o_t = lax.dot_general(
                v_t, p_t.astype(cdt),
                dimension_numbers=(((1,), (0,)), ((), ())),
                preferred_element_type=jnp.float32)
            # Deferred softmax normalization: (1, tq) row of denominators (EUP).
            o_t = o_t * pl.reciprocal(l, approx=approx_recip)
            headsT_ref[pl.ds(row, head_dim), :] = o_t.astype(cdt)
            return c

        # Short fixed trip count -> unroll for LLO scheduler visibility.
        lax.fori_loop(0, num_heads, head_body, 0, unroll=True)

        # Per-tile out_proj directly in (tq, D): contract headsT dim 0 with Wo
        # dim 0.  No epilogue transpose; HBM store is lane-dense over D.
        out_t = lax.dot_general(
            headsT_ref[...], wo_ref[...],
            dimension_numbers=(((0,), (0,)), ((), ())),
            preferred_element_type=jnp.float32) + bo_ref[...]
        o_ref[0, pl.ds(qo, q_tile), :] = out_t.astype(o_ref.dtype)
        return carry

    lax.fori_loop(0, n_q_tiles, q_tile_body, 0)


def _grid_invariant_spec(shape):
    """BlockSpec for an operand fetched once per call: single-buffered."""
    zeros = (0,) * len(shape)

    def index_map(b):
        return zeros

    try:
        return pl.BlockSpec(shape, index_map, pipeline_mode=pl.Buffered(1))
    except (TypeError, AttributeError):   # pipeline_mode unavailable -> default
        return pl.BlockSpec(shape, index_map)


def _vmem_limit_bytes():
    # Generation-aware budget: ~7/8 of physical VMEM, leaving headroom for
    # Mosaic internal scratch (v7x: ~56 of 64 MiB; v5e/v6e: ~112 of 128 MiB).
    try:
        cap = getattr(pltpu.get_tpu_info(), "vmem_capacity_bytes", None)
        if cap:
            return int(cap) * 7 // 8
    except Exception:
        pass
    return 56 * 1024 * 1024


def multi_head_self_attention(x, wq, wk, wv, wo, bq, bk, bv, bo, *, num_heads,
                              approx_recip=True):
    """x: (B, N, D). Weights in math convention (y = x @ W + b), each (D, D); biases (D,)."""
    B, N, D = x.shape
    hd = D // num_heads
    cdt = x.dtype
    scale = 1.0 / float(np.sqrt(hd))

    # Pad the sequence to a lane-dense multiple of 128; padded key columns are
    # masked inside the kernel, padded query rows are sliced off afterwards.
    n_pad = ((N + 127) // 128) * 128
    x_in = jnp.pad(x, ((0, 0), (0, n_pad - N), (0, 0))) if n_pad != N else x
    q_tile = 256 if (n_pad >= 256 and n_pad % 256 == 0) else 128

    # Fused, transposed projection weights; the softmax scale is folded into the
    # Q weights/bias so the kernel never scales the score matrix.  Weights are
    # cast to the input dtype (bf16-ready); biases stay f32.
    wqkv_t = jnp.concatenate([wq * scale, wk, wv], axis=1).T.astype(cdt)   # (3D, D)
    bqkv = jnp.concatenate([bq * scale, bk, bv]).reshape(3 * D, 1).astype(jnp.float32)
    wo_c = wo.astype(cdt)                                                   # (D, D)
    bo_row = bo.reshape(1, D).astype(jnp.float32)

    kernel = functools.partial(_mhsa_kernel, num_heads=num_heads, head_dim=hd,
                               n_valid=N, q_tile=q_tile,
                               approx_recip=approx_recip)

    itemsize = jnp.dtype(cdt).itemsize
    flops = B * (8 * n_pad * D * D + 4 * n_pad * n_pad * D)
    transcendentals = B * num_heads * n_pad * n_pad
    bytes_accessed = (2 * B * n_pad * D + 4 * D * D) * itemsize + 4 * (3 * D + D)

    # TODO(synk): for v7x small-batch (B==1) inference, split the QKV projection
    # into its own pallas_call and promote the query-tile loop to a second
    # "parallel" grid axis so both TensorCores get work without a batch axis.
    out_pad = pl.pallas_call(
        kernel,
        out_shape=jax.ShapeDtypeStruct((B, n_pad, D), x.dtype),
        grid_spec=pltpu.PrefetchScalarGridSpec(
            num_scalar_prefetch=0,
            grid=(B,),
            in_specs=[
                pl.BlockSpec((1, n_pad, D), lambda b: (b, 0, 0)),   # x: one batch/step
                _grid_invariant_spec((3 * D, D)),                    # fused Wqkv^T
                _grid_invariant_spec((D, D)),                        # Wo (un-transposed)
                _grid_invariant_spec((3 * D, 1)),                    # fused bias (f32)
                _grid_invariant_spec((1, D)),                        # out bias row (f32)
            ],
            out_specs=pl.BlockSpec((1, n_pad, D), lambda b: (b, 0, 0)),
            scratch_shapes=[
                pltpu.VMEM((3 * D, n_pad), cdt),     # qkv^T slab
                pltpu.VMEM((D, q_tile), cdt),        # head outputs^T for one q-tile
            ],
        ),
        compiler_params=pltpu.CompilerParams(
            dimension_semantics=("parallel",),
            vmem_limit_bytes=_vmem_limit_bytes(),
        ),
        cost_estimate=pl.CostEstimate(
            flops=flops,
            transcendentals=transcendentals,
            bytes_accessed=bytes_accessed),
    )(x_in, wqkv_t, wo_c, bqkv, bo_row)

    return out_pad[:, :N, :] if n_pad != N else out_pad


def _reference(x, wq, wk, wv, wo, bq, bk, bv, bo, *, num_heads):
    """Pure-JAX mirror of the PyTorch forward pass (for verification)."""
    B, N, D = x.shape
    hd = D // num_heads
    q = x @ wq + bq
    k = x @ wk + bk
    v = x @ wv + bv
    q = q.reshape(B, N, num_heads, hd).transpose(0, 2, 1, 3)
    k = k.reshape(B, N, num_heads, hd).transpose(0, 2, 1, 3)
    v = v.reshape(B, N, num_heads, hd).transpose(0, 2, 1, 3)
    s = jnp.einsum("bhqd,bhkd->bhqk", q, k) / np.sqrt(hd)
    w = jax.nn.softmax(s, axis=-1)
    o = jnp.einsum("bhqk,bhkd->bhqd", w, v)
    o = o.transpose(0, 2, 1, 3).reshape(B, N, D)
    return o @ wo + bo


if __name__ == "__main__":
    B, N, D, H = 2, 8, 32, 4   # batch, seq, embed_dim, num_heads (head_dim = 8)

    key = jax.random.PRNGKey(0)
    ks = jax.random.split(key, 9)
    x = jax.random.normal(ks[0], (B, N, D), jnp.float32)
    wq = jax.random.normal(ks[1], (D, D), jnp.float32) * 0.05
    wk = jax.random.normal(ks[2], (D, D), jnp.float32) * 0.05
    wv = jax.random.normal(ks[3], (D, D), jnp.float32) * 0.05
    wo = jax.random.normal(ks[4], (D, D), jnp.float32) * 0.05
    bq = jax.random.normal(ks[5], (D,), jnp.float32) * 0.01
    bk = jax.random.normal(ks[6], (D,), jnp.float32) * 0.01
    bv = jax.random.normal(ks[7], (D,), jnp.float32) * 0.01
    bo = jax.random.normal(ks[8], (D,), jnp.float32) * 0.01

    out = multi_head_self_attention(x, wq, wk, wv, wo, bq, bk, bv, bo,
                                    num_heads=H)
    out = jax.block_until_ready(out)

    ref = _reference(x, wq, wk, wv, wo, bq, bk, bv, bo, num_heads=H)
    # Tolerance accounts for the (flagged, default-on) EUP approximate reciprocal
    # used for the softmax denominator.
    np.testing.assert_allclose(np.asarray(out), np.asarray(ref),
                               rtol=1e-2, atol=1e-2)
    print("KERNEL_OK")
</pallas_src>

<mosaic_0001>
module attributes {stable_mosaic.version = 11 : i64} {
  func.func @_mhsa_kernel(%arg0: i32, %arg1: memref<1x128x32xf32, #tpu.memory_space<vmem>>, %arg2: memref<96x32xf32, #tpu.memory_space<vmem>>, %arg3: memref<32x32xf32, #tpu.memory_space<vmem>>, %arg4: memref<96x1xf32, #tpu.memory_space<vmem>>, %arg5: memref<1x32xf32, #tpu.memory_space<vmem>>, %arg6: memref<1x128x32xf32, #tpu.memory_space<vmem>>, %arg7: memref<96x128xf32, #tpu.memory_space<vmem>>, %arg8: memref<32x128xf32, #tpu.memory_space<vmem>>) attributes {dimension_semantics = [#tpu.dimension_semantics<parallel>], iteration_bounds = array<i64: 2>, scalar_prefetch = 0 : i64, scratch_operands = 2 : i64, tpu.core_type = #tpu.core_type<tc>, window_params = [{transform_indices = @transform_0, window_bounds = array<i64: 1, 128, 32>}, {pipeline_mode = #tpu.pipeline_mode<synchronous>, transform_indices = @transform_1, window_bounds = array<i64: 96, 32>}, {pipeline_mode = #tpu.pipeline_mode<synchronous>, transform_indices = @transform_2, window_bounds = array<i64: 32, 32>}, {pipeline_mode = #tpu.pipeline_mode<synchronous>, transform_indices = @transform_3, window_bounds = array<i64: 96, 1>}, {pipeline_mode = #tpu.pipeline_mode<synchronous>, transform_indices = @transform_4, window_bounds = array<i64: 1, 32>}, {transform_indices = @transform_5, window_bounds = array<i64: 1, 128, 32>}]} {
    %c0 = arith.constant 0 : index
    %c0_0 = arith.constant 0 : index
    %c0_1 = arith.constant 0 : index
    %0 = vector.load %arg1[%c0, %c0_0, %c0_1] : memref<1x128x32xf32, #tpu.memory_space<vmem>>, vector<1x128x32xf32>
    %1 = vector.shape_cast %0 : vector<1x128x32xf32> to vector<128x32xf32>
    %c0_2 = arith.constant 0 : index
    %c0_3 = arith.constant 0 : index
    %2 = vector.load %arg2[%c0_2, %c0_3] : memref<96x32xf32, #tpu.memory_space<vmem>>, vector<96x32xf32>
    %cst = arith.constant dense<0.000000e+00> : vector<96x128xf32>
    %3 = tpu.matmul %2, %1, %cst {dimension_numbers = #tpu.dot_dimension_numbers<[1], [1], [0], [0], [0, 0, 1, 0], [], []>} : vector<96x32xf32>, vector<128x32xf32>, vector<96x128xf32> -> vector<96x128xf32>
    %c0_4 = arith.constant 0 : index
    %c0_5 = arith.constant 0 : index
    %4 = vector.load %arg4[%c0_4, %c0_5] : memref<96x1xf32, #tpu.memory_space<vmem>>, vector<96x1xf32>
    %5 = vector.broadcast %4 : vector<96x1xf32> to vector<96x128xf32>
    %6 = arith.addf %3, %5 : vector<96x128xf32>
    %c0_6 = arith.constant 0 : index
    %c0_7 = arith.constant 0 : index
    %7 = vector.load %arg7[%c0_6, %c0_7] : memref<96x128xf32, #tpu.memory_space<vmem>>, vector<96x128xf32>
    tpu.vector_store %arg7[%c0_6, %c0_7], %6 {strides = array<i32>} : memref<96x128xf32, #tpu.memory_space<vmem>>, vector<96x128xf32>,
    %8 = tpu.iota {dimensions = array<i32: 0>} : vector<128x1xi32>
    %c8_i32 = arith.constant 8 : i32
    %9 = vector.broadcast %c8_i32 : i32 to vector<128x1xi32>
    %10 = arith.cmpi slt, %8, %9 : vector<128x1xi32>
    %cst_8 = arith.constant 0.000000e+00 : f32
    %cst_9 = arith.constant -1.000000e+30 : f32
    %11 = vector.broadcast %cst_8 : f32 to vector<128x1xf32>
    %12 = vector.broadcast %cst_9 : f32 to vector<128x1xf32>
    %13 = arith.select %10, %11, %12 : vector<128x1xi1>, vector<128x1xf32>
    %c0_i32 = arith.constant 0 : i32
    %c128_i32 = arith.constant 128 : i32
    %14 = arith.muli %c0_i32, %c128_i32 : i32
    %15 = tpu.assume_multiple %14, 128 : i32
    %c0_i32_10 = arith.constant 0 : i32
    %c8_i32_11 = arith.constant 8 : i32
    %16 = arith.muli %c0_i32_10, %c8_i32_11 : i32
    %17 = tpu.assume_multiple %16, 8 : i32
    %18 = arith.index_cast %17 : i32 to index
    %19 = arith.index_cast %15 : i32 to index
    %20 = vector.load %arg7[%18, %19] : memref<96x128xf32, #tpu.memory_space<vmem>>, vector<8x128xf32>
    %c32_i32 = arith.constant 32 : i32
    %21 = arith.addi %c32_i32, %17 : i32
    %22 = arith.index_cast %21 : i32 to index
    %c0_12 = arith.constant 0 : index
    %23 = vector.load %arg7[%22, %c0_12] : memref<96x128xf32, #tpu.memory_space<vmem>>, vector<8x128xf32>
    %c64_i32 = arith.constant 64 : i32
    %24 = arith.addi %c64_i32, %17 : i32
    %25 = arith.index_cast %24 : i32 to index
    %c0_13 = arith.constant 0 : index
    %26 = vector.load %arg7[%25, %c0_13] : memref<96x128xf32, #tpu.memory_space<vmem>>, vector<8x128xf32>
    %cst_14 = arith.constant dense<0.000000e+00> : vector<128x128xf32>
    %27 = tpu.matmul %23, %20, %cst_14 {dimension_numbers = #tpu.dot_dimension_numbers<[0], [0], [1], [1], [0, 1, 1, 1], [], []>} : vector<8x128xf32>, vector<8x128xf32>, vector<128x128xf32> -> vector<128x128xf32>
    %28 = vector.broadcast %13 : vector<128x1xf32> to vector<128x128xf32>
    %29 = arith.addf %27, %28 : vector<128x128xf32>
    %cst_15 = arith.constant dense<0xFF800000> : vector<128xf32>
    %30 = vector.multi_reduction <maximumf>, %29, %cst_15 [0] : vector<128x128xf32> to vector<128xf32>
    %31 = vector.shape_cast %30 : vector<128xf32> to vector<1x128xf32>
    %32 = vector.broadcast %31 : vector<1x128xf32> to vector<128x128xf32>
    %33 = arith.subf %29, %32 : vector<128x128xf32>
    %34 = math.exp %33 : vector<128x128xf32>
    %cst_16 = arith.constant dense<0.000000e+00> : vector<128xf32>
    %35 = vector.multi_reduction <add>, %34, %cst_16 [0] : vector<128x128xf32> to vector<128xf32>
    %36 = vector.shape_cast %35 : vector<128xf32> to vector<1x128xf32>
    %cst_17 = arith.constant dense<0.000000e+00> : vector<8x128xf32>
    %37 = tpu.matmul %26, %34, %cst_17 {dimension_numbers = #tpu.dot_dimension_numbers<[1], [0], [0], [1], [0, 0, 1, 1], [], []>} : vector<8x128xf32>, vector<128x128xf32>, vector<8x128xf32> -> vector<8x128xf32>
    %38 = tpu.reciprocal %36 {approx = true} : vector<1x128xf32> -> vector<1x128xf32>
    %39 = vector.broadcast %38 : vector<1x128xf32> to vector<8x128xf32>
    %40 = arith.mulf %37, %39 : vector<8x128xf32>
    %41 = arith.index_cast %17 : i32 to index
    %c0_18 = arith.constant 0 : index
    %42 = vector.load %arg8[%41, %c0_18] : memref<32x128xf32, #tpu.memory_space<vmem>>, vector<8x128xf32>
    tpu.vector_store %arg8[%41, %c0_18], %40 {strides = array<i32>} : memref<32x128xf32, #tpu.memory_space<vmem>>, vector<8x128xf32>,
    %c1_i32 = arith.constant 1 : i32
    %c8_i32_19 = arith.constant 8 : i32
    %43 = arith.muli %c1_i32, %c8_i32_19 : i32
    %44 = tpu.assume_multiple %43, 8 : i32
    %45 = arith.index_cast %44 : i32 to index
    %46 = arith.index_cast %15 : i32 to index
    %47 = vector.load %arg7[%45, %46] : memref<96x128xf32, #tpu.memory_space<vmem>>, vector<8x128xf32>
    %c32_i32_20 = arith.constant 32 : i32
    %48 = arith.addi %c32_i32_20, %44 : i32
    %49 = arith.index_cast %48 : i32 to index
    %c0_21 = arith.constant 0 : index
    %50 = vector.load %arg7[%49, %c0_21] : memref<96x128xf32, #tpu.memory_space<vmem>>, vector<8x128xf32>
    %c64_i32_22 = arith.constant 64 : i32
    %51 = arith.addi %c64_i32_22, %44 : i32
    %52 = arith.index_cast %51 : i32 to index
    %c0_23 = arith.constant 0 : index
    %53 = vector.load %arg7[%52, %c0_23] : memref<96x128xf32, #tpu.memory_space<vmem>>, vector<8x128xf32>
    %cst_24 = arith.constant dense<0.000000e+00> : vector<128x128xf32>
    %54 = tpu.matmul %50, %47, %cst_24 {dimension_numbers = #tpu.dot_dimension_numbers<[0], [0], [1], [1], [0, 1, 1, 1], [], []>} : vector<8x128xf32>, vector<8x128xf32>, vector<128x128xf32> -> vector<128x128xf32>
    %55 = vector.broadcast %13 : vector<128x1xf32> to vector<128x128xf32>
    %56 = arith.addf %54, %55 : vector<128x128xf32>
    %cst_25 = arith.constant dense<0xFF800000> : vector<128xf32>
    %57 = vector.multi_reduction <maximumf>, %56, %cst_25 [0] : vector<128x128xf32> to vector<128xf32>
    %58 = vector.shape_cast %57 : vector<128xf32> to vector<1x128xf32>
    %59 = vector.broadcast %58 : vector<1x128xf32> to vector<128x128xf32>
    %60 = arith.subf %56, %59 : vector<128x128xf32>
    %61 = math.exp %60 : vector<128x128xf32>
    %cst_26 = arith.constant dense<0.000000e+00> : vector<128xf32>
    %62 = vector.multi_reduction <add>, %61, %cst_26 [0] : vector<128x128xf32> to vector<128xf32>
    %63 = vector.shape_cast %62 : vector<128xf32> to vector<1x128xf32>
    %cst_27 = arith.constant dense<0.000000e+00> : vector<8x128xf32>
    %64 = tpu.matmul %53, %61, %cst_27 {dimension_numbers = #tpu.dot_dimension_numbers<[1], [0], [0], [1], [0, 0, 1, 1], [], []>} : vector<8x128xf32>, vector<128x128xf32>, vector<8x128xf32> -> vector<8x128xf32>
    %65 = tpu.reciprocal %63 {approx = true} : vector<1x128xf32> -> vector<1x128xf32>
    %66 = vector.broadcast %65 : vector<1x128xf32> to vector<8x128xf32>
    %67 = arith.mulf %64, %66 : vector<8x128xf32>
    %68 = arith.index_cast %44 : i32 to index
    %c0_28 = arith.constant 0 : index
    %69 = vector.load %arg8[%68, %c0_28] : memref<32x128xf32, #tpu.memory_space<vmem>>, vector<8x128xf32>
    tpu.vector_store %arg8[%68, %c0_28], %67 {strides = array<i32>} : memref<32x128xf32, #tpu.memory_space<vmem>>, vector<8x128xf32>,
    %c2_i32 = arith.constant 2 : i32
    %c8_i32_29 = arith.constant 8 : i32
    %70 = arith.muli %c2_i32, %c8_i32_29 : i32
    %71 = tpu.assume_multiple %70, 8 : i32
    %72 = arith.index_cast %71 : i32 to index
    %73 = arith.index_cast %15 : i32 to index
    %74 = vector.load %arg7[%72, %73] : memref<96x128xf32, #tpu.memory_space<vmem>>, vector<8x128xf32>
    %c32_i32_30 = arith.constant 32 : i32
    %75 = arith.addi %c32_i32_30, %71 : i32
    %76 = arith.index_cast %75 : i32 to index
    %c0_31 = arith.constant 0 : index
    %77 = vector.load %arg7[%76, %c0_31] : memref<96x128xf32, #tpu.memory_space<vmem>>, vector<8x128xf32>
    %c64_i32_32 = arith.constant 64 : i32
    %78 = arith.addi %c64_i32_32, %71 : i32
    %79 = arith.index_cast %78 : i32 to index
    %c0_33 = arith.constant 0 : index
    %80 = vector.load %arg7[%79, %c0_33] : memref<96x128xf32, #tpu.memory_space<vmem>>, vector<8x128xf32>
    %cst_34 = arith.constant dense<0.000000e+00> : vector<128x128xf32>
    %81 = tpu.matmul %77, %74, %cst_34 {dimension_numbers = #tpu.dot_dimension_numbers<[0], [0], [1], [1], [0, 1, 1, 1], [], []>} : vector<8x128xf32>, vector<8x128xf32>, vector<128x128xf32> -> vector<128x128xf32>
    %82 = vector.broadcast %13 : vector<128x1xf32> to vector<128x128xf32>
    %83 = arith.addf %81, %82 : vector<128x128xf32>
    %cst_35 = arith.constant dense<0xFF800000> : vector<128xf32>
    %84 = vector.multi_reduction <maximumf>, %83, %cst_35 [0] : vector<128x128xf32> to vector<128xf32>
    %85 = vector.shape_cast %84 : vector<128xf32> to vector<1x128xf32>
    %86 = vector.broadcast %85 : vector<1x128xf32> to vector<128x128xf32>
    %87 = arith.subf %83, %86 : vector<128x128xf32>
    %88 = math.exp %87 : vector<128x128xf32>
    %cst_36 = arith.constant dense<0.000000e+00> : vector<128xf32>
    %89 = vector.multi_reduction <add>, %88, %cst_36 [0] : vector<128x128xf32> to vector<128xf32>
    %90 = vector.shape_cast %89 : vector<128xf32> to vector<1x128xf32>
    %cst_37 = arith.constant dense<0.000000e+00> : vector<8x128xf32>
    %91 = tpu.matmul %80, %88, %cst_37 {dimension_numbers = #tpu.dot_dimension_numbers<[1], [0], [0], [1], [0, 0, 1, 1], [], []>} : vector<8x128xf32>, vector<128x128xf32>, vector<8x128xf32> -> vector<8x128xf32>
    %92 = tpu.reciprocal %90 {approx = true} : vector<1x128xf32> -> vector<1x128xf32>
    %93 = vector.broadcast %92 : vector<1x128xf32> to vector<8x128xf32>
    %94 = arith.mulf %91, %93 : vector<8x128xf32>
    %95 = arith.index_cast %71 : i32 to index
    %c0_38 = arith.constant 0 : index
    %96 = vector.load %arg8[%95, %c0_38] : memref<32x128xf32, #tpu.memory_space<vmem>>, vector<8x128xf32>
    tpu.vector_store %arg8[%95, %c0_38], %94 {strides = array<i32>} : memref<32x128xf32, #tpu.memory_space<vmem>>, vector<8x128xf32>,
    %c3_i32 = arith.constant 3 : i32
    %c8_i32_39 = arith.constant 8 : i32
    %97 = arith.muli %c3_i32, %c8_i32_39 : i32
    %98 = tpu.assume_multiple %97, 8 : i32
    %99 = arith.index_cast %98 : i32 to index
    %100 = arith.index_cast %15 : i32 to index
    %101 = vector.load %arg7[%99, %100] : memref<96x128xf32, #tpu.memory_space<vmem>>, vector<8x128xf32>
    %c32_i32_40 = arith.constant 32 : i32
    %102 = arith.addi %c32_i32_40, %98 : i32
    %103 = arith.index_cast %102 : i32 to index
    %c0_41 = arith.constant 0 : index
    %104 = vector.load %arg7[%103, %c0_41] : memref<96x128xf32, #tpu.memory_space<vmem>>, vector<8x128xf32>
    %c64_i32_42 = arith.constant 64 : i32
    %105 = arith.addi %c64_i32_42, %98 : i32
    %106 = arith.index_cast %105 : i32 to index
    %c0_43 = arith.constant 0 : index
    %107 = vector.load %arg7[%106, %c0_43] : memref<96x128xf32, #tpu.memory_space<vmem>>, vector<8x128xf32>
    %cst_44 = arith.constant dense<0.000000e+00> : vector<128x128xf32>
    %108 = tpu.matmul %104, %101, %cst_44 {dimension_numbers = #tpu.dot_dimension_numbers<[0], [0], [1], [1], [0, 1, 1, 1], [], []>} : vector<8x128xf32>, vector<8x128xf32>, vector<128x128xf32> -> vector<128x128xf32>
    %109 = vector.broadcast %13 : vector<128x1xf32> to vector<128x128xf32>
    %110 = arith.addf %108, %109 : vector<128x128xf32>
    %cst_45 = arith.constant dense<0xFF800000> : vector<128xf32>
    %111 = vector.multi_reduction <maximumf>, %110, %cst_45 [0] : vector<128x128xf32> to vector<128xf32>
    %112 = vector.shape_cast %111 : vector<128xf32> to vector<1x128xf32>
    %113 = vector.broadcast %112 : vector<1x128xf32> to vector<128x128xf32>
    %114 = arith.subf %110, %113 : vector<128x128xf32>
    %115 = math.exp %114 : vector<128x128xf32>
    %cst_46 = arith.constant dense<0.000000e+00> : vector<128xf32>
    %116 = vector.multi_reduction <add>, %115, %cst_46 [0] : vector<128x128xf32> to vector<128xf32>
    %117 = vector.shape_cast %116 : vector<128xf32> to vector<1x128xf32>
    %cst_47 = arith.constant dense<0.000000e+00> : vector<8x128xf32>
    %118 = tpu.matmul %107, %115, %cst_47 {dimension_numbers = #tpu.dot_dimension_numbers<[1], [0], [0], [1], [0, 0, 1, 1], [], []>} : vector<8x128xf32>, vector<128x128xf32>, vector<8x128xf32> -> vector<8x128xf32>
    %119 = tpu.reciprocal %117 {approx = true} : vector<1x128xf32> -> vector<1x128xf32>
    %120 = vector.broadcast %119 : vector<1x128xf32> to vector<8x128xf32>
    %121 = arith.mulf %118, %120 : vector<8x128xf32>
    %122 = arith.index_cast %98 : i32 to index
    %c0_48 = arith.constant 0 : index
    %123 = vector.load %arg8[%122, %c0_48] : memref<32x128xf32, #tpu.memory_space<vmem>>, vector<8x128xf32>
    tpu.vector_store %arg8[%122, %c0_48], %121 {strides = array<i32>} : memref<32x128xf32, #tpu.memory_space<vmem>>, vector<8x128xf32>,
    %c4_i32 = arith.constant 4 : i32
    %c0_49 = arith.constant 0 : index
    %c0_50 = arith.constant 0 : index
    %124 = vector.load %arg8[%c0_49, %c0_50] : memref<32x128xf32, #tpu.memory_space<vmem>>, vector<32x128xf32>
    %c0_51 = arith.constant 0 : index
    %c0_52 = arith.constant 0 : index
    %125 = vector.load %arg3[%c0_51, %c0_52] : memref<32x32xf32, #tpu.memory_space<vmem>>, vector<32x32xf32>
    %cst_53 = arith.constant dense<0.000000e+00> : vector<128x32xf32>
    %126 = tpu.matmul %124, %125, %cst_53 {dimension_numbers = #tpu.dot_dimension_numbers<[0], [0], [1], [1], [0, 1, 1, 1], [], []>} : vector<32x128xf32>, vector<32x32xf32>, vector<128x32xf32> -> vector<128x32xf32>
    %c0_54 = arith.constant 0 : index
    %c0_55 = arith.constant 0 : index
    %127 = vector.load %arg5[%c0_54, %c0_55] : memref<1x32xf32, #tpu.memory_space<vmem>>, vector<1x32xf32>
    %128 = vector.broadcast %127 : vector<1x32xf32> to vector<128x32xf32>
    %129 = arith.addf %126, %128 : vector<128x32xf32>
    %c0_56 = arith.constant 0 : index
    %130 = arith.index_cast %15 : i32 to index
    %c0_57 = arith.constant 0 : index
    %131 = vector.load %arg6[%c0_56, %130, %c0_57] : memref<1x128x32xf32, #tpu.memory_space<vmem>>, vector<1x128x32xf32>
    %132 = vector.shape_cast %131 : vector<1x128x32xf32> to vector<128x32xf32>
    %133 = vector.shape_cast %129 : vector<128x32xf32> to vector<1x128x32xf32>
    tpu.vector_store %arg6[%c0_56, %130, %c0_57], %133 {strides = array<i32>} : memref<1x128x32xf32, #tpu.memory_space<vmem>>, vector<1x128x32xf32>,
    %c1_i32_58 = arith.constant 1 : i32
    return
  }
  func.func @transform_0(%arg0: i32) -> (i32, i32, i32) {
    %c0_i32 = arith.constant 0 : i32
    %c0_i32_0 = arith.constant 0 : i32
    %c0_i32_1 = arith.constant 0 : i32
    return %arg0, %c0_i32, %c0_i32_0 : i32, i32, i32
  }
  func.func @transform_1(%arg0: i32) -> (i32, i32) {
    %c0_i32 = arith.constant 0 : i32
    %c0_i32_0 = arith.constant 0 : i32
    %c0_i32_1 = arith.constant 0 : i32
    return %c0_i32, %c0_i32_0 : i32, i32
  }
  func.func @transform_2(%arg0: i32) -> (i32, i32) {
    %c0_i32 = arith.constant 0 : i32
    %c0_i32_0 = arith.constant 0 : i32
    %c0_i32_1 = arith.constant 0 : i32
    return %c0_i32, %c0_i32_0 : i32, i32
  }
  func.func @transform_3(%arg0: i32) -> (i32, i32) {
    %c0_i32 = arith.constant 0 : i32
    %c0_i32_0 = arith.constant 0 : i32
    %c0_i32_1 = arith.constant 0 : i32
    return %c0_i32, %c0_i32_0 : i32, i32
  }
  func.func @transform_4(%arg0: i32) -> (i32, i32) {
    %c0_i32 = arith.constant 0 : i32
    %c0_i32_0 = arith.constant 0 : i32
    %c0_i32_1 = arith.constant 0 : i32
    return %c0_i32, %c0_i32_0 : i32, i32
  }
  func.func @transform_5(%arg0: i32) -> (i32, i32, i32) {
    %c0_i32 = arith.constant 0 : i32
    %c0_i32_0 = arith.constant 0 : i32
    %c0_i32_1 = arith.constant 0 : i32
    return %arg0, %c0_i32, %c0_i32_0 : i32, i32, i32
  }
}

</mosaic_0001>

<llo_original>
// kernel: tpu_custom_call.1
$region0: #{tpu_custom_call.1}
  #allocation0 [shape = 'u32[]', space=smem, size = 0x4, offset = 0x4, fixed_abs, tag = 'smem constant byte address 0x4 - core index']
  #allocation1 [shape = 'u32[144,128]{1,0:T(1,128)}', space=vmem, size = 0x12000, scoped, tag = 'internal scratch']
  #allocation2 [shape = 'f32[96,128]{1,0:T(8,128)}', space=vmem, size = 0xc000, scoped, tag = 'scratch operand']
  #allocation3 [shape = 'f32[32,128]{1,0:T(8,128)}', space=vmem, size = 0x4000, scoped, tag = 'scratch operand']
  %s0 = inlined_call_operand.vmem [shape: f32[2,128,32], index: 0, kind: input, shape index: {}]
  %s1 = inlined_call_operand.vmem [shape: f32[96,32], index: 1, kind: input, shape index: {}]
  %s2 = inlined_call_operand.vmem [shape: f32[32,32], index: 2, kind: input, shape index: {}]
  %s3 = inlined_call_operand.vmem [shape: f32[96,1], index: 3, kind: input, shape index: {}]
  %s4 = inlined_call_operand.vmem [shape: f32[1,32], index: 4, kind: input, shape index: {}]
  %s5 = inlined_call_operand.vmem [shape: f32[2,128,32], index: 5, kind: output, shape index: {}]
  %s6 = sld [smem:[#allocation0]]
  $region53: #{tpu_custom_call.1} parent=0
    _
  %s8 = ssub.s32 1, %s6
  %s9 = scalar_select 0, %s8, %s6
  loop: start=0, step=1, limit=4
  $region2: #{tpu_custom_call.1} parent=0 // loop_pre_header
    _
  $region3: #{tpu_custom_call.1} parent=0 // loop_header
    %s11 = sphi 0, %s15
    %p12 = scmp.ge.s32.totalorder %s11, 4
    %s21 = sphi 0, %s23
    %s24 = sphi 0, %s21
    %s25 = sphi 0, %s24
    %s41 = sphi 0, %s25
    %s45 = sphi 0, %s45
    %s47 = sphi 0, %s45
    %s48 = sphi 0, %s47
    %s62 = sphi 0, %s48
    %s66 = sphi 0, %s66
    %s68 = sphi 0, %s66
    %s69 = sphi 0, %s68
    %s83 = sphi 0, %s69
    %s87 = sphi 0, %s87
    %s89 = sphi 0, %s87
    %s90 = sphi 0, %s89
    %s104 = sphi 0, %s90
    %s108 = sphi 0, %s108
    %s110 = sphi 0, %s108
    %s111 = sphi 0, %s110
    %s125 = sphi 0, %s111
    %s131 = sphi 0, %s133
    %s134 = sphi 0, %s131
    %s135 = sphi 0, %s134
    %s151 = sphi 0, %s135
  $region4: #{tpu_custom_call.1} parent=0 // loop_header_branch
    %14 = sbr.rel (%p12) target = $region8
  $region5: #{tpu_custom_call.1} parent=0 // loop_body
    %s16 = ssub.s32 %s11, 1
    %s17 = ssub.s32 %s11, 2
    %s18 = sadd.s32 %s11, 1
    %s19 = ssub.s32 %s11, %s18
    %p20 = scmp.eq.s32.totalorder %s19, 0
    %s22 = sadd.s32 %s21, 1
    %s23 = scalar_select %p20, %s21, %s22
    %p26 = pneg %p20
    %p27 = scmp.eq.s32.totalorder %s11, 1
    %p28 = por %p26, %p27
    %p29 = scmp.ne.s32.totalorder %s21, %s24
    %p30 = scmp.eq.s32.totalorder %s11, 0
    %p31 = por %p29, %p30
    %p32 = scmp.ne.s32.totalorder %s21, %s24
    %p33 = scmp.eq.s32.totalorder %s16, 1
    %p34 = por %p32, %p33
    %p35 = scmp.ne.s32.totalorder %s24, %s25
    %p36 = scmp.eq.s32.totalorder %s16, 0
    %p37 = por %p35, %p36
    %p38 = scmp.ne.s32.totalorder %s24, %s25
    %p39 = scmp.eq.s32.totalorder %s17, 1
    %p40 = por %p38, %p39
    %p42 = scmp.ne.s32.totalorder %s25, %s41
    %p43 = scmp.eq.s32.totalorder %s17, 0
    %p44 = por %p42, %p43
    %s46 = sadd.s32 %s45, 1
    %p49 = scmp.eq.s32.totalorder %s11, 1
    %p50 = scmp.ne.s32.totalorder %s45, %s47
    %p51 = scmp.eq.s32.totalorder %s11, 0
    %p52 = por %p50, %p51
    %p53 = scmp.ne.s32.totalorder %s45, %s47
    %p54 = scmp.eq.s32.totalorder %s16, 1
    %p55 = por %p53, %p54
    %p56 = scmp.ne.s32.totalorder %s47, %s48
    %p57 = scmp.eq.s32.totalorder %s16, 0
    %p58 = por %p56, %p57
    %p59 = scmp.ne.s32.totalorder %s47, %s48
    %p60 = scmp.eq.s32.totalorder %s17, 1
    %p61 = por %p59, %p60
    %p63 = scmp.ne.s32.totalorder %s48, %s62
    %p64 = scmp.eq.s32.totalorder %s17, 0
    %p65 = por %p63, %p64
    %s67 = sadd.s32 %s66, 1
    %p70 = scmp.eq.s32.totalorder %s11, 1
    %p71 = scmp.ne.s32.totalorder %s66, %s68
    %p72 = scmp.eq.s32.totalorder %s11, 0
    %p73 = por %p71, %p72
    %p74 = scmp.ne.s32.totalorder %s66, %s68
    %p75 = scmp.eq.s32.totalorder %s16, 1
    %p76 = por %p74, %p75
    %p77 = scmp.ne.s32.totalorder %s68, %s69
    %p78 = scmp.eq.s32.totalorder %s16, 0
    %p79 = por %p77, %p78
    %p80 = scmp.ne.s32.totalorder %s68, %s69
    %p81 = scmp.eq.s32.totalorder %s17, 1
    %p82 = por %p80, %p81
    %p84 = scmp.ne.s32.totalorder %s69, %s83
    %p85 = scmp.eq.s32.totalorder %s17, 0
    %p86 = por %p84, %p85
    %s88 = sadd.s32 %s87, 1
    %p91 = scmp.eq.s32.totalorder %s11, 1
    %p92 = scmp.ne.s32.totalorder %s87, %s89
    %p93 = scmp.eq.s32.totalorder %s11, 0
    %p94 = por %p92, %p93
    %p95 = scmp.ne.s32.totalorder %s87, %s89
    %p96 = scmp.eq.s32.totalorder %s16, 1
    %p97 = por %p95, %p96
    %p98 = scmp.ne.s32.totalorder %s89, %s90
    %p99 = scmp.eq.s32.totalorder %s16, 0
    %p100 = por %p98, %p99
    %p101 = scmp.ne.s32.totalorder %s89, %s90
    %p102 = scmp.eq.s32.totalorder %s17, 1
    %p103 = por %p101, %p102
    %p105 = scmp.ne.s32.totalorder %s90, %s104
    %p106 = scmp.eq.s32.totalorder %s17, 0
    %p107 = por %p105, %p106
    %s109 = sadd.s32 %s108, 1
    %p112 = scmp.eq.s32.totalorder %s11, 1
    %p113 = scmp.ne.s32.totalorder %s108, %s110
    %p114 = scmp.eq.s32.totalorder %s11, 0
    %p115 = por %p113, %p114
    %p116 = scmp.ne.s32.totalorder %s108, %s110
    %p117 = scmp.eq.s32.totalorder %s16, 1
    %p118 = por %p116, %p117
    %p119 = scmp.ne.s32.totalorder %s110, %s111
    %p120 = scmp.eq.s32.totalorder %s16, 0
    %p121 = por %p119, %p120
    %p122 = scmp.ne.s32.totalorder %s110, %s111
    %p123 = scmp.eq.s32.totalorder %s17, 1
    %p124 = por %p122, %p123
    %p126 = scmp.ne.s32.totalorder %s111, %s125
    %p127 = scmp.eq.s32.totalorder %s17, 0
    %p128 = por %p126, %p127
    %s129 = ssub.s32 %s11, %s18
    %p130 = scmp.eq.s32.totalorder %s129, 0
    %s132 = sadd.s32 %s131, 1
    %s133 = scalar_select %p130, %s131, %s132
    %p136 = pneg %p130
    %p137 = scmp.eq.s32.totalorder %s11, 1
    %p138 = por %p136, %p137
    %p139 = scmp.ne.s32.totalorder %s131, %s134
    %p140 = scmp.eq.s32.totalorder %s11, 0
    %p141 = por %p139, %p140
    %p142 = scmp.ne.s32.totalorder %s131, %s134
    %p143 = scmp.eq.s32.totalorder %s16, 1
    %p144 = por %p142, %p143
    %p145 = scmp.ne.s32.totalorder %s134, %s135
    %p146 = scmp.eq.s32.totalorder %s16, 0
    %p147 = por %p145, %p146
    %p148 = scmp.ne.s32.totalorder %s134, %s135
    %p149 = scmp.eq.s32.totalorder %s17, 1
    %p150 = por %p148, %p149
    %p152 = scmp.ne.s32.totalorder %s135, %s151
    %p153 = scmp.eq.s32.totalorder %s17, 0
    %p154 = por %p152, %p153
    %p155 = scmp.le.s32.totalorder 1, %s11
    %p156 = scmp.lt.s32.totalorder %s11, 3
    %p157 = pnand %p155, %p156
    %p158 = pneg %p157
    // Predicated region
    $region9: #{tpu_custom_call.1} parent=5 // pred_check
      _
    $region10: #{tpu_custom_call.1} parent=5 // pred_check_branch
      %160 = sbr.rel (%p157) target = $region12
    $region11: #{tpu_custom_call.1} parent=5 // pred_region
      %s161 = ssub.s32 %s11, 1
      // Predicated region
      $region13: #{tpu_custom_call.1} parent=11 // pred_check
        %p162 = pneg %p58
      $region14: #{tpu_custom_call.1} parent=11 // pred_check_branch
        %164 = sbr.rel (%p162) target = $region16
      $region15: #{tpu_custom_call.1} parent=11 // pred_region
        _
      $region16: #{tpu_custom_call.1} parent=11 // pred_fallthru
        _
      // Predicated region
      $region17: #{tpu_custom_call.1} parent=11 // pred_check
        %p165 = pneg %p79
      $region18: #{tpu_custom_call.1} parent=11 // pred_check_branch
        %167 = sbr.rel (%p165) target = $region20
      $region19: #{tpu_custom_call.1} parent=11 // pred_region
        _
      $region20: #{tpu_custom_call.1} parent=11 // pred_fallthru
        _
      // Predicated region
      $region21: #{tpu_custom_call.1} parent=11 // pred_check
        %p168 = pneg %p100
      $region22: #{tpu_custom_call.1} parent=11 // pred_check_branch
        %170 = sbr.rel (%p168) target = $region24
      $region23: #{tpu_custom_call.1} parent=11 // pred_region
        _
      $region24: #{tpu_custom_call.1} parent=11 // pred_fallthru
        _
      // Predicated region
      $region25: #{tpu_custom_call.1} parent=11 // pred_check
        %p171 = pneg %p121
      $region26: #{tpu_custom_call.1} parent=11 // pred_check_branch
        %173 = sbr.rel (%p171) target = $region28
      $region27: #{tpu_custom_call.1} parent=11 // pred_region
        _
      $region28: #{tpu_custom_call.1} parent=11 // pred_fallthru
        _
    $region12: #{tpu_custom_call.1} parent=5 // pred_fallthru
      _
    %p174 = scmp.lt.s32.totalorder %s11, 2
    // Predicated region
    $region29: #{tpu_custom_call.1} parent=5 // pred_check
      %p175 = pneg %p174
    $region30: #{tpu_custom_call.1} parent=5 // pred_check_branch
      %177 = sbr.rel (%p175) target = $region32
    $region31: #{tpu_custom_call.1} parent=5 // pred_region
      // Predicated region
      $region33: #{tpu_custom_call.1} parent=31 // pred_check
        %p178 = pneg %p31
      $region34: #{tpu_custom_call.1} parent=31 // pred_check_branch
        %180 = sbr.rel (%p178) target = $region36
      $region35: #{tpu_custom_call.1} parent=31 // pred_region
        %p181 = scmp.lt.s32.totalorder %s11, 1
        %s182 = scalar_select %p181, %s11, 1
        %s183 = smul.addr %s182, 16
        %s184 = smul.addr %s183, 8
        %s185 = scalar_lea.vmem %s0, %s184
      $region36: #{tpu_custom_call.1} parent=31 // pred_fallthru
        _
    $region32: #{tpu_custom_call.1} parent=5 // pred_fallthru
      _
    %p186 = scmp.le.s32.totalorder 1, %s11
    %p187 = scmp.lt.s32.totalorder %s11, 3
    %p188 = pnand %p186, %p187
    %p189 = pneg %p188
    // Predicated region
    $region37: #{tpu_custom_call.1} parent=5 // pred_check
      _
    $region38: #{tpu_custom_call.1} parent=5 // pred_check_branch
      %191 = sbr.rel (%p188) target = $region40
    $region39: #{tpu_custom_call.1} parent=5 // pred_region
      %s192 = ssub.s32 %s11, 1
      %p193 = scmp.lt.s32.totalorder %s16, 1
      %s194 = scalar_select %p193, %s16, 1
      %s195 = smul.addr %s194, 16
      %s196 = smul.addr %s195, 8
      %s197 = scalar_lea.vmem %s0, %s196
      %p198 = pneg %p37
      %p199 = pneg %p34
      %p200 = pneg %p58
      %p201 = pneg %p55
      %p202 = pneg %p79
      %p203 = pneg %p76
      %p204 = pneg %p100
      %p205 = pneg %p97
      %p206 = pneg %p121
      %p207 = pneg %p118
      %p208 = pneg %p147
      %p209 = pneg %p144
      %p210 = scmp.lt.s32.totalorder %s16, 1
      %s211 = scalar_select %p210, %s16, 1
      %s212 = smul.addr %s211, 16
      %s213 = smul.addr %s212, 8
      %s214 = scalar_lea.vmem %s5, %s213
      %p215 = scmp.lt.s32.totalorder %s16, 1
      %s216 = scalar_select %p215, %s16, 1
      %s217 = smul.addr %s216, 16
      %s218 = smul.addr %s217, 8
      %s219 = scalar_lea.vmem %s0, %s218
      %p220 = scmp.lt.s32.totalorder %s16, 1
      %s221 = scalar_select %p220, %s16, 1
      %s222 = smul.addr %s221, 16
      %s223 = smul.addr %s222, 8
      %s224 = scalar_lea.vmem %s5, %s223
      %v225 = vld [vmem:[%s219] sm:$0xff]
      %v226 = vld [vmem:[%s219 + $0x8] sm:$0xff]
      %v227 = vld [vmem:[%s219 + $0x10] sm:$0xff]
      %v228 = vld [vmem:[%s219 + $0x18] sm:$0xff]
      %v229 = vld [vmem:[%s219 + $0x20] sm:$0xff]
      %v230 = vld [vmem:[%s219 + $0x28] sm:$0xff]
      %v231 = vld [vmem:[%s219 + $0x30] sm:$0xff]
      %v232 = vld [vmem:[%s219 + $0x38] sm:$0xff]
      %v233 = vld [vmem:[%s219 + $0x40] sm:$0xff]
      %v234 = vld [vmem:[%s219 + $0x48] sm:$0xff]
      %v235 = vld [vmem:[%s219 + $0x50] sm:$0xff]
      %v236 = vld [vmem:[%s219 + $0x58] sm:$0xff]
      %v237 = vld [vmem:[%s219 + $0x60] sm:$0xff]
      %v238 = vld [vmem:[%s219 + $0x68] sm:$0xff]
      %v239 = vld [vmem:[%s219 + $0x70] sm:$0xff]
      %v240 = vld [vmem:[%s219 + $0x78] sm:$0xff]
      %v241 = vld [vmem:[%s1] sm:$0xff]
      %v242 = vld [vmem:[%s1 + $0x8] sm:$0xff]
      %v243 = vld [vmem:[%s1 + $0x10] sm:$0xff]
      %v244 = vld [vmem:[%s1 + $0x18] sm:$0xff]
      %v245 = vld [vmem:[%s1 + $0x20] sm:$0xff]
      %v246 = vld [vmem:[%s1 + $0x28] sm:$0xff]
      %v247 = vld [vmem:[%s1 + $0x30] sm:$0xff]
      %v248 = vld [vmem:[%s1 + $0x38] sm:$0xff]
      %v249 = vld [vmem:[%s1 + $0x40] sm:$0xff]
      %v250 = vld [vmem:[%s1 + $0x48] sm:$0xff]
      %v251 = vld [vmem:[%s1 + $0x50] sm:$0xff]
      %v252 = vld [vmem:[%s1 + $0x58] sm:$0xff]
      %v253 = vld [vmem:[%s3] sm:$0xff]
      %v254 = vld [vmem:[%s3 + $0x8] sm:$0xff]
      %v255 = vld [vmem:[%s3 + $0x10] sm:$0xff]
      %v256 = vld [vmem:[%s3 + $0x18] sm:$0xff]
      %v257 = vld [vmem:[%s3 + $0x20] sm:$0xff]
      %v258 = vld [vmem:[%s3 + $0x28] sm:$0xff]
      %v259 = vld [vmem:[%s3 + $0x30] sm:$0xff]
      %v260 = vld [vmem:[%s3 + $0x38] sm:$0xff]
      %v261 = vld [vmem:[%s3 + $0x40] sm:$0xff]
      %v262 = vld [vmem:[%s3 + $0x48] sm:$0xff]
      %v263 = vld [vmem:[%s3 + $0x50] sm:$0xff]
      %v264 = vld [vmem:[%s3 + $0x58] sm:$0xff]
      %266 = vset.pattern.permute.xlu0 0
      %267 = vperm.xlu0 %266, %v253
      %v268 = vpop.permute.xlu0 %267
      %271 = vset.pattern.permute.xlu0 0
      %272 = vperm.xlu0 %271, %v254
      %v273 = vpop.permute.xlu0 %272
      %276 = vset.pattern.permute.xlu0 0
      %277 = vperm.xlu0 %276, %v255
      %v278 = vpop.permute.xlu0 %277
      %281 = vset.pattern.permute.xlu0 0
      %282 = vperm.xlu0 %281, %v256
      %v283 = vpop.permute.xlu0 %282
      %286 = vset.pattern.permute.xlu0 0
      %287 = vperm.xlu0 %286, %v257
      %v288 = vpop.permute.xlu0 %287
      %291 = vset.pattern.permute.xlu0 0
      %292 = vperm.xlu0 %291, %v258
      %v293 = vpop.permute.xlu0 %292
      %296 = vset.pattern.permute.xlu0 0
      %297 = vperm.xlu0 %296, %v259
      %v298 = vpop.permute.xlu0 %297
      %301 = vset.pattern.permute.xlu0 0
      %302 = vperm.xlu0 %301, %v260
      %v303 = vpop.permute.xlu0 %302
      %306 = vset.pattern.permute.xlu0 0
      %307 = vperm.xlu0 %306, %v261
      %v308 = vpop.permute.xlu0 %307
      %311 = vset.pattern.permute.xlu0 0
      %312 = vperm.xlu0 %311, %v262
      %v313 = vpop.permute.xlu0 %312
      %316 = vset.pattern.permute.xlu0 0
      %317 = vperm.xlu0 %316, %v263
      %v318 = vpop.permute.xlu0 %317
      %321 = vset.pattern.permute.xlu0 0
      %322 = vperm.xlu0 %321, %v264
      %v323 = vpop.permute.xlu0 %322
      %vm325 = vcmask 261120
      %v327 = vsel %vm325, %v241, 0
      %v330 = vsel %vm325, %v242, 0
      %v333 = vsel %vm325, %v243, 0
      %v336 = vsel %vm325, %v244, 0
      %v339 = vsel %vm325, %v245, 0
      %v342 = vsel %vm325, %v246, 0
      %v345 = vsel %vm325, %v247, 0
      %v348 = vsel %vm325, %v248, 0
      %v351 = vsel %vm325, %v249, 0
      %v354 = vsel %vm325, %v250, 0
      %v357 = vsel %vm325, %v251, 0
      %v360 = vsel %vm325, %v252, 0
      %v363 = vsel %vm325, %v225, 0
      %v366 = vsel %vm325, %v226, 0
      %v369 = vsel %vm325, %v227, 0
      %v372 = vsel %vm325, %v228, 0
      %v375 = vsel %vm325, %v229, 0
      %v378 = vsel %vm325, %v230, 0
      %v381 = vsel %vm325, %v231, 0
      %v384 = vsel %vm325, %v232, 0
      %v387 = vsel %vm325, %v233, 0
      %v390 = vsel %vm325, %v234, 0
      %v393 = vsel %vm325, %v235, 0
      %v396 = vsel %vm325, %v236, 0
      %v399 = vsel %vm325, %v237, 0
      %v402 = vsel %vm325, %v238, 0
      %v405 = vsel %vm325, %v239, 0
      %v408 = vsel %vm325, %v240, 0
      %410 = vmatprep.subr.mxu0 0.0
      %411 = vmatpush1.xpose.msra.mxu0 %v363
      %412 = vmatprep.subr.mxu0 0.0
      %413 = vmatpush1.xpose.msra.mxu0 %v366
      %414 = vmatprep.subr.mxu0 0.0
      %415 = vmatpush1.xpose.msra.mxu0 %v369
      %416 = vmatprep.subr.mxu0 0.0
      %417 = vmatpush1.xpose.msra.mxu0 %v372
      %418 = vmatprep.subr.mxu0 0.0
      %419 = vmatpush1.xpose.msra.mxu0 %v375
      %420 = vmatprep.subr.mxu0 0.0
      %421 = vmatpush1.xpose.msra.mxu0 %v378
      %422 = vmatprep.subr.mxu0 0.0
      %423 = vmatpush1.xpose.msra.mxu0 %v381
      %424 = vmatprep.subr.mxu0 0.0
      %425 = vmatpush1.xpose.msra.mxu0 %v384
      %426 = vmatprep.subr.mxu0 0.0
      %427 = vmatpush1.xpose.msra.mxu0 %v387
      %428 = vmatprep.subr.mxu0 0.0
      %429 = vmatpush1.xpose.msra.mxu0 %v390
      %430 = vmatprep.subr.mxu0 0.0
      %431 = vmatpush1.xpose.msra.mxu0 %v393
      %432 = vmatprep.subr.mxu0 0.0
      %433 = vmatpush1.xpose.msra.mxu0 %v396
      %434 = vmatprep.subr.mxu0 0.0
      %435 = vmatpush1.xpose.msra.mxu0 %v399
      %436 = vmatprep.subr.mxu0 0.0
      %437 = vmatpush1.xpose.msra.mxu0 %v402
      %438 = vmatprep.subr.mxu0 0.0
      %439 = vmatpush1.xpose.msra.mxu0 %v405
      %440 = vmatprep.subr.mxu0 0.0
      %441 = vmatpush1.xpose.msra.mxu0 %v408
      %442 = vmatprep.subr.mxu0 0.0
      %443 = vmatpush1.xpose.msra.mxu0 0.0
      %444 = vmatprep.subr.mxu0 0.0
      %445 = vmatpush1.xpose.msra.mxu0 0.0
      %446 = vmatprep.subr.mxu0 0.0
      %447 = vmatpush1.xpose.msra.mxu0 0.0
      %448 = vmatprep.subr.mxu0 0.0
      %449 = vmatpush1.xpose.msra.mxu0 0.0
      %450 = vmatprep.subr.mxu0 0.0
      %451 = vmatpush1.xpose.msra.mxu0 0.0
      %452 = vmatprep.subr.mxu0 0.0
      %453 = vmatpush1.xpose.msra.mxu0 0.0
      %454 = vmatprep.subr.mxu0 0.0
      %455 = vmatpush1.xpose.msra.mxu0 0.0
      %456 = vmatprep.subr.mxu0 0.0
      %457 = vmatpush1.xpose.msra.mxu0 0.0
      %458 = vmatprep.subr.mxu0 0.0
      %459 = vmatpush1.xpose.msra.mxu0 0.0
      %460 = vmatprep.subr.mxu0 0.0
      %461 = vmatpush1.xpose.msra.mxu0 0.0
      %462 = vmatprep.subr.mxu0 0.0
      %463 = vmatpush1.xpose.msra.mxu0 0.0
      %464 = vmatprep.subr.mxu0 0.0
      %465 = vmatpush1.xpose.msra.mxu0 0.0
      %466 = vmatprep.subr.mxu0 0.0
      %467 = vmatpush1.xpose.msra.mxu0 0.0
      %468 = vmatprep.subr.mxu0 0.0
      %469 = vmatpush1.xpose.msra.mxu0 0.0
      %470 = vmatprep.subr.mxu0 0.0
      %471 = vmatpush1.xpose.msra.mxu0 0.0
      %472 = vmatprep.subr.mxu0 0.0
      %473 = vmatpush1.xpose.msra.mxu0 0.0
      %474 = vmatprep.mubr.f32.mxu0 0.0
      %475 = vmatmul.mubr.f32.gmra.mrb[0].mxu0 %v327
      %v476 = vpop.f32.mrb[0].mxu0
      %v477 = vadd.f32 %v268, %v476
      %v478 = vpop.f32.mrb[0].mxu0
      %479 = vmatprep.mubr.f32.mxu0 0.0
      %480 = vmatmul.mubr.f32.gmra.mrb[0].mxu0 %v330
      %v481 = vpop.f32.mrb[0].mxu0
      %v482 = vadd.f32 %v273, %v481
      %v483 = vpop.f32.mrb[0].mxu0
      %484 = vmatprep.mubr.f32.mxu0 0.0
      %485 = vmatmul.mubr.f32.gmra.mrb[0].mxu0 %v333
      %v486 = vpop.f32.mrb[0].mxu0
      %v487 = vadd.f32 %v278, %v486
      %v488 = vpop.f32.mrb[0].mxu0
      %489 = vmatprep.mubr.f32.mxu0 0.0
      %490 = vmatmul.mubr.f32.gmra.mrb[0].mxu0 %v336
      %v491 = vpop.f32.mrb[0].mxu0
      %v492 = vadd.f32 %v283, %v491
      %v493 = vpop.f32.mrb[0].mxu0
      %494 = vmatprep.mubr.f32.mxu0 0.0
      %495 = vmatmul.mubr.f32.gmra.mrb[0].mxu0 %v339
      %v496 = vpop.f32.mrb[0].mxu0
      %v497 = vadd.f32 %v288, %v496
      %v498 = vpop.f32.mrb[0].mxu0
      %499 = vmatprep.mubr.f32.mxu0 0.0
      %500 = vmatmul.mubr.f32.gmra.mrb[0].mxu0 %v342
      %v501 = vpop.f32.mrb[0].mxu0
      %v502 = vadd.f32 %v293, %v501
      %v503 = vpop.f32.mrb[0].mxu0
      %504 = vmatprep.mubr.f32.mxu0 0.0
      %505 = vmatmul.mubr.f32.gmra.mrb[0].mxu0 %v345
      %v506 = vpop.f32.mrb[0].mxu0
      %v507 = vadd.f32 %v298, %v506
      %v508 = vpop.f32.mrb[0].mxu0
      %509 = vmatprep.mubr.f32.mxu0 0.0
      %510 = vmatmul.mubr.f32.gmra.mrb[0].mxu0 %v348
      %v511 = vpop.f32.mrb[0].mxu0
      %v512 = vadd.f32 %v303, %v511
      %v513 = vpop.f32.mrb[0].mxu0
      %514 = vmatprep.mubr.f32.mxu0 0.0
      %515 = vmatmul.mubr.f32.gmra.mrb[0].mxu0 %v351
      %v516 = vpop.f32.mrb[0].mxu0
      %v517 = vadd.f32 %v308, %v516
      %v518 = vpop.f32.mrb[0].mxu0
      %519 = vmatprep.mubr.f32.mxu0 0.0
      %520 = vmatmul.mubr.f32.gmra.mrb[0].mxu0 %v354
      %v521 = vpop.f32.mrb[0].mxu0
      %v522 = vadd.f32 %v313, %v521
      %v523 = vpop.f32.mrb[0].mxu0
      %524 = vmatprep.mubr.f32.mxu0 0.0
      %525 = vmatmul.mubr.f32.gmra.mrb[0].mxu0 %v357
      %v526 = vpop.f32.mrb[0].mxu0
      %v527 = vadd.f32 %v318, %v526
      %v528 = vpop.f32.mrb[0].mxu0
      %529 = vmatprep.mubr.f32.mxu0 0.0
      %530 = vmatmul.mubr.f32.gmra.mrb[0].mxu0 %v360
      %v531 = vpop.f32.mrb[0].mxu0
      %v532 = vadd.f32 %v323, %v531
      %v533 = vpop.f32.mrb[0].mxu0
      %534 = vdwg.mxu0
      %535 = vst [vmem:[#allocation2] sm:$0xff] %v477
      %536 = vst [vmem:[#allocation2 + $0x8] sm:$0xff] %v482
      %537 = vst [vmem:[#allocation2 + $0x10] sm:$0xff] %v487
      %538 = vst [vmem:[#allocation2 + $0x18] sm:$0xff] %v492
      %539 = vst [vmem:[#allocation2 + $0x20] sm:$0xff] %v497
      %540 = vst [vmem:[#allocation2 + $0x28] sm:$0xff] %v502
      %541 = vst [vmem:[#allocation2 + $0x30] sm:$0xff] %v507
      %542 = vst [vmem:[#allocation2 + $0x38] sm:$0xff] %v512
      %543 = vst [vmem:[#allocation2 + $0x40] sm:$0xff] %v517
      %544 = vst [vmem:[#allocation2 + $0x48] sm:$0xff] %v522
      %545 = vst [vmem:[#allocation2 + $0x50] sm:$0xff] %v527
      %546 = vst [vmem:[#allocation2 + $0x58] sm:$0xff] %v532
      %v547 = vlaneseq
      %v548 = vshrl.u32 %v547, 7
      %v549 = vadd.s32 %v548, 8
      %v550 = vadd.s32 %v548, 16
      %v551 = vadd.s32 %v548, 24
      %v552 = vadd.s32 %v548, 32
      %v553 = vadd.s32 %v548, 40
      %v554 = vadd.s32 %v548, 48
      %v555 = vadd.s32 %v548, 56
      %v556 = vadd.s32 %v548, 64
      %v557 = vadd.s32 %v548, 72
      %v558 = vadd.s32 %v548, 80
      %v559 = vadd.s32 %v548, 88
      %v560 = vadd.s32 %v548, 96
      %v561 = vadd.s32 %v548, 104
      %v562 = vadd.s32 %v548, 112
      %v563 = vadd.s32 %v548, 120
      %vm564 = vcmp.lt.s32.totalorder %v548, 8
      %vm565 = vcmp.lt.s32.totalorder %v549, 8
      %vm566 = vcmp.lt.s32.totalorder %v550, 8
      %vm567 = vcmp.lt.s32.totalorder %v551, 8
      %vm568 = vcmp.lt.s32.totalorder %v552, 8
      %vm569 = vcmp.lt.s32.totalorder %v553, 8
      %vm570 = vcmp.lt.s32.totalorder %v554, 8
      %vm571 = vcmp.lt.s32.totalorder %v555, 8
      %vm572 = vcmp.lt.s32.totalorder %v556, 8
      %vm573 = vcmp.lt.s32.totalorder %v557, 8
      %vm574 = vcmp.lt.s32.totalorder %v558, 8
      %vm575 = vcmp.lt.s32.totalorder %v559, 8
      %vm576 = vcmp.lt.s32.totalorder %v560, 8
      %vm577 = vcmp.lt.s32.totalorder %v561, 8
      %vm578 = vcmp.lt.s32.totalorder %v562, 8
      %vm579 = vcmp.lt.s32.totalorder %v563, 8
      %v580 = vsel %vm564, 0.0, -1e+30
      %v581 = vsel %vm565, 0.0, -1e+30
      %v582 = vsel %vm566, 0.0, -1e+30
      %v583 = vsel %vm567, 0.0, -1e+30
      %v584 = vsel %vm568, 0.0, -1e+30
      %v585 = vsel %vm569, 0.0, -1e+30
      %v586 = vsel %vm570, 0.0, -1e+30
      %v587 = vsel %vm571, 0.0, -1e+30
      %v588 = vsel %vm572, 0.0, -1e+30
      %v589 = vsel %vm573, 0.0, -1e+30
      %v590 = vsel %vm574, 0.0, -1e+30
      %v591 = vsel %vm575, 0.0, -1e+30
      %v592 = vsel %vm576, 0.0, -1e+30
      %v593 = vsel %vm577, 0.0, -1e+30
      %v594 = vsel %vm578, 0.0, -1e+30
      %v595 = vsel %vm579, 0.0, -1e+30
      %s596 = sadd.s32 0, 0
      %s597 = scalar_lea.vmem [#allocation2], %s596
      %v598 = vld [vmem:[%s597] sm:$0xff]
      %s599 = sadd.s32 0, 32
      %s600 = scalar_lea.vmem [#allocation2], %s599
      %v601 = vld [vmem:[%s600] sm:$0xff]
      %s602 = sadd.s32 0, 64
      %s603 = scalar_lea.vmem [#allocation2], %s602
      %v604 = vld [vmem:[%s603] sm:$0xff]
      %605 = vxpose.xlu0.b32.start [1/16] %v601, 128
      %606 = vxpose.xlu0.b32.cont [2/16] 0.0, 128
      %607 = vxpose.xlu0.b32.cont [3/16] 0.0, 128
      %608 = vxpose.xlu0.b32.cont [4/16] 0.0, 128
      %609 = vxpose.xlu0.b32.cont [5/16] 0.0, 128
      %610 = vxpose.xlu0.b32.cont [6/16] 0.0, 128
      %611 = vxpose.xlu0.b32.cont [7/16] 0.0, 128
      %612 = vxpose.xlu0.b32.cont [8/16] 0.0, 128
      %613 = vxpose.xlu0.b32.cont [9/16] 0.0, 128
      %614 = vxpose.xlu0.b32.cont [10/16] 0.0, 128
      %615 = vxpose.xlu0.b32.cont [11/16] 0.0, 128
      %616 = vxpose.xlu0.b32.cont [12/16] 0.0, 128
      %617 = vxpose.xlu0.b32.cont [13/16] 0.0, 128
      %618 = vxpose.xlu0.b32.cont [14/16] 0.0, 128
      %619 = vxpose.xlu0.b32.cont [15/16] 0.0, 128
      %620 = vxpose.xlu0.b32.end [16/16] 0.0, 128
      %v621 = vpop.trf.xlu0
      %v622 = vpop.trf.xlu0
      %v623 = vpop.trf.xlu0
      %v624 = vpop.trf.xlu0
      %v625 = vpop.trf.xlu0
      %v626 = vpop.trf.xlu0
      %v627 = vpop.trf.xlu0
      %v628 = vpop.trf.xlu0
      %v629 = vpop.trf.xlu0
      %v630 = vpop.trf.xlu0
      %v631 = vpop.trf.xlu0
      %v632 = vpop.trf.xlu0
      %v633 = vpop.trf.xlu0
      %v634 = vpop.trf.xlu0
      %v635 = vpop.trf.xlu0
      %v636 = vpop.trf.xlu0
      %vm637 = vcmask 64512
      %v639 = vsel %vm637, %v621, 0
      %v642 = vsel %vm637, %v622, 0
      %v645 = vsel %vm637, %v623, 0
      %v648 = vsel %vm637, %v624, 0
      %v651 = vsel %vm637, %v625, 0
      %v654 = vsel %vm637, %v626, 0
      %v657 = vsel %vm637, %v627, 0
      %v660 = vsel %vm637, %v628, 0
      %v663 = vsel %vm637, %v629, 0
      %v666 = vsel %vm637, %v630, 0
      %v669 = vsel %vm637, %v631, 0
      %v672 = vsel %vm637, %v632, 0
      %v675 = vsel %vm637, %v633, 0
      %v678 = vsel %vm637, %v634, 0
      %v681 = vsel %vm637, %v635, 0
      %v684 = vsel %vm637, %v636, 0
      %686 = vmatprep.subr.mxu0 0.0
      %687 = vmatpush1.msra.mxu0 %v598
      %688 = vmatprep.subr.mxu0 0.0
      %689 = vmatpush1.msra.mxu0 0.0
      %690 = vmatprep.subr.mxu0 0.0
      %691 = vmatpush1.msra.mxu0 0.0
      %692 = vmatprep.subr.mxu0 0.0
      %693 = vmatpush1.msra.mxu0 0.0
      %694 = vmatprep.subr.mxu0 0.0
      %695 = vmatpush1.msra.mxu0 0.0
      %696 = vmatprep.subr.mxu0 0.0
      %697 = vmatpush1.msra.mxu0 0.0
      %698 = vmatprep.subr.mxu0 0.0
      %699 = vmatpush1.msra.mxu0 0.0
      %700 = vmatprep.subr.mxu0 0.0
      %701 = vmatpush1.msra.mxu0 0.0
      %702 = vmatprep.subr.mxu0 0.0
      %703 = vmatpush1.msra.mxu0 0.0
      %704 = vmatprep.subr.mxu0 0.0
      %705 = vmatpush1.msra.mxu0 0.0
      %706 = vmatprep.subr.mxu0 0.0
      %707 = vmatpush1.msra.mxu0 0.0
      %708 = vmatprep.subr.mxu0 0.0
      %709 = vmatpush1.msra.mxu0 0.0
      %710 = vmatprep.subr.mxu0 0.0
      %711 = vmatpush1.msra.mxu0 0.0
      %712 = vmatprep.subr.mxu0 0.0
      %713 = vmatpush1.msra.mxu0 0.0
      %714 = vmatprep.subr.mxu0 0.0
      %715 = vmatpush1.msra.mxu0 0.0
      %716 = vmatprep.subr.mxu0 0.0
      %717 = vmatpush1.msra.mxu0 0.0
      %718 = vmatprep.subr.mxu0 0.0
      %719 = vmatpush1.msra.mxu0 0.0
      %720 = vmatprep.subr.mxu0 0.0
      %721 = vmatpush1.msra.mxu0 0.0
      %722 = vmatprep.subr.mxu0 0.0
      %723 = vmatpush1.msra.mxu0 0.0
      %724 = vmatprep.subr.mxu0 0.0
      %725 = vmatpush1.msra.mxu0 0.0
      %726 = vmatprep.subr.mxu0 0.0
      %727 = vmatpush1.msra.mxu0 0.0
      %728 = vmatprep.subr.mxu0 0.0
      %729 = vmatpush1.msra.mxu0 0.0
      %730 = vmatprep.subr.mxu0 0.0
      %731 = vmatpush1.msra.mxu0 0.0
      %732 = vmatprep.subr.mxu0 0.0
      %733 = vmatpush1.msra.mxu0 0.0
      %734 = vmatprep.subr.mxu0 0.0
      %735 = vmatpush1.msra.mxu0 0.0
      %736 = vmatprep.subr.mxu0 0.0
      %737 = vmatpush1.msra.mxu0 0.0
      %738 = vmatprep.subr.mxu0 0.0
      %739 = vmatpush1.msra.mxu0 0.0
      %740 = vmatprep.subr.mxu0 0.0
      %741 = vmatpush1.msra.mxu0 0.0
      %742 = vmatprep.subr.mxu0 0.0
      %743 = vmatpush1.msra.mxu0 0.0
      %744 = vmatprep.subr.mxu0 0.0
      %745 = vmatpush1.msra.mxu0 0.0
      %746 = vmatprep.subr.mxu0 0.0
      %747 = vmatpush1.msra.mxu0 0.0
      %748 = vmatprep.subr.mxu0 0.0
      %749 = vmatpush1.msra.mxu0 0.0
      %750 = vmatprep.mubr.f32.mxu0 0.0
      %751 = vmatmul.mubr.f32.gmra.mrb[0].mxu0 %v639
      %v752 = vpop.f32.mrb[0].mxu0
      %v753 = vadd.f32 %v580, %v752
      %v754 = vpop.f32.mrb[0].mxu0
      %755 = vmatprep.mubr.f32.mxu0 0.0
      %756 = vmatmul.mubr.f32.gmra.mrb[0].mxu0 %v642
      %v757 = vpop.f32.mrb[0].mxu0
      %v758 = vadd.f32 %v581, %v757
      %v759 = vpop.f32.mrb[0].mxu0
      %760 = vmatprep.mubr.f32.mxu0 0.0
      %761 = vmatmul.mubr.f32.gmra.mrb[0].mxu0 %v645
      %v762 = vpop.f32.mrb[0].mxu0
      %v763 = vadd.f32 %v582, %v762
      %v764 = vpop.f32.mrb[0].mxu0
      %765 = vmatprep.mubr.f32.mxu0 0.0
      %766 = vmatmul.mubr.f32.gmra.mrb[0].mxu0 %v648
      %v767 = vpop.f32.mrb[0].mxu0
      %v768 = vadd.f32 %v583, %v767
      %v769 = vpop.f32.mrb[0].mxu0
      %770 = vmatprep.mubr.f32.mxu0 0.0
      %771 = vmatmul.mubr.f32.gmra.mrb[0].mxu0 %v651
      %v772 = vpop.f32.mrb[0].mxu0
      %v773 = vadd.f32 %v584, %v772
      %v774 = vpop.f32.mrb[0].mxu0
      %775 = vmatprep.mubr.f32.mxu0 0.0
      %776 = vmatmul.mubr.f32.gmra.mrb[0].mxu0 %v654
      %v777 = vpop.f32.mrb[0].mxu0
      %v778 = vadd.f32 %v585, %v777
      %v779 = vpop.f32.mrb[0].mxu0
      %780 = vmatprep.mubr.f32.mxu0 0.0
      %781 = vmatmul.mubr.f32.gmra.mrb[0].mxu0 %v657
      %v782 = vpop.f32.mrb[0].mxu0
      %v783 = vadd.f32 %v586, %v782
      %v784 = vpop.f32.mrb[0].mxu0
      %785 = vmatprep.mubr.f32.mxu0 0.0
      %786 = vmatmul.mubr.f32.gmra.mrb[0].mxu0 %v660
      %v787 = vpop.f32.mrb[0].mxu0
      %v788 = vadd.f32 %v587, %v787
      %v789 = vpop.f32.mrb[0].mxu0
      %790 = vmatprep.mubr.f32.mxu0 0.0
      %791 = vmatmul.mubr.f32.gmra.mrb[0].mxu0 %v663
      %v792 = vpop.f32.mrb[0].mxu0
      %v793 = vadd.f32 %v588, %v792
      %v794 = vpop.f32.mrb[0].mxu0
      %795 = vmatprep.mubr.f32.mxu0 0.0
      %796 = vmatmul.mubr.f32.gmra.mrb[0].mxu0 %v666
      %v797 = vpop.f32.mrb[0].mxu0
      %v798 = vadd.f32 %v589, %v797
      %v799 = vpop.f32.mrb[0].mxu0
      %800 = vmatprep.mubr.f32.mxu0 0.0
      %801 = vmatmul.mubr.f32.gmra.mrb[0].mxu0 %v669
      %v802 = vpop.f32.mrb[0].mxu0
      %v803 = vadd.f32 %v590, %v802
      %v804 = vpop.f32.mrb[0].mxu0
      %805 = vmatprep.mubr.f32.mxu0 0.0
      %806 = vmatmul.mubr.f32.gmra.mrb[0].mxu0 %v672
      %v807 = vpop.f32.mrb[0].mxu0
      %v808 = vadd.f32 %v591, %v807
      %v809 = vpop.f32.mrb[0].mxu0
      %810 = vmatprep.mubr.f32.mxu0 0.0
      %811 = vmatmul.mubr.f32.gmra.mrb[0].mxu0 %v675
      %v812 = vpop.f32.mrb[0].mxu0
      %v813 = vadd.f32 %v592, %v812
      %v814 = vpop.f32.mrb[0].mxu0
      %815 = vmatprep.mubr.f32.mxu0 0.0
      %816 = vmatmul.mubr.f32.gmra.mrb[0].mxu0 %v678
      %v817 = vpop.f32.mrb[0].mxu0
      %v818 = vadd.f32 %v593, %v817
      %v819 = vpop.f32.mrb[0].mxu0
      %820 = vmatprep.mubr.f32.mxu0 0.0
      %821 = vmatmul.mubr.f32.gmra.mrb[0].mxu0 %v681
      %v822 = vpop.f32.mrb[0].mxu0
      %v823 = vadd.f32 %v594, %v822
      %v824 = vpop.f32.mrb[0].mxu0
      %825 = vmatprep.mubr.f32.mxu0 0.0
      %826 = vmatmul.mubr.f32.gmra.mrb[0].mxu0 %v684
      %v827 = vpop.f32.mrb[0].mxu0
      %v828 = vadd.f32 %v595, %v827
      %v829 = vpop.f32.mrb[0].mxu0
      %830 = vdwg.mxu0
      %v831 = vmax.f32 %v753, %v773
      %v832 = vmax.f32 %v758, %v778
      %v833 = vmax.f32 %v763, %v783
      %v834 = vmax.f32 %v768, %v788
      %v835 = vmax.f32 %v831, %v793
      %v836 = vmax.f32 %v832, %v798
      %v837 = vmax.f32 %v833, %v803
      %v838 = vmax.f32 %v834, %v808
      %v839 = vmax.f32 %v835, %v813
      %v840 = vmax.f32 %v836, %v818
      %v841 = vmax.f32 %v837, %v823
      %v842 = vmax.f32 %v838, %v828
      %v843 = vmax.f32 %v839, %v840
      %v844 = vmax.f32 %v841, %v842
      %v845 = vmax.f32 %v843, %v844
      %v846 = vrot.slane %v845, 4
      %v847 = vmax.f32 %v845, %v846
      %v848 = vrot.slane %v847, 2
      %v849 = vmax.f32 %v847, %v848
      %v850 = vrot.slane %v849, 1
      %v851 = vmax.f32 %v849, %v850
      %v852 = vsub.f32 %v753, %v851
      %v853 = vsub.f32 %v758, %v851
      %v854 = vsub.f32 %v763, %v851
      %v855 = vsub.f32 %v768, %v851
      %v856 = vsub.f32 %v773, %v851
      %v857 = vsub.f32 %v778, %v851
      %v858 = vsub.f32 %v783, %v851
      %v859 = vsub.f32 %v788, %v851
      %v860 = vsub.f32 %v793, %v851
      %v861 = vsub.f32 %v798, %v851
      %v862 = vsub.f32 %v803, %v851
      %v863 = vsub.f32 %v808, %v851
      %v864 = vsub.f32 %v813, %v851
      %v865 = vsub.f32 %v818, %v851
      %v866 = vsub.f32 %v823, %v851
      %v867 = vsub.f32 %v828, %v851
      %v868 = vmul.f32 %v852, 1.442695
      %v869 = vpow.pop %v868
      %v870 = vmul.f32 %v853, 1.442695
      %v871 = vpow.pop %v870
      %v872 = vmul.f32 %v854, 1.442695
      %v873 = vpow.pop %v872
      %v874 = vmul.f32 %v855, 1.442695
      %v875 = vpow.pop %v874
      %v876 = vmul.f32 %v856, 1.442695
      %v877 = vpow.pop %v876
      %v878 = vmul.f32 %v857, 1.442695
      %v879 = vpow.pop %v878
      %v880 = vmul.f32 %v858, 1.442695
      %v881 = vpow.pop %v880
      %v882 = vmul.f32 %v859, 1.442695
      %v883 = vpow.pop %v882
      %v884 = vmul.f32 %v860, 1.442695
      %v885 = vpow.pop %v884
      %v886 = vmul.f32 %v861, 1.442695
      %v887 = vpow.pop %v886
      %v888 = vmul.f32 %v862, 1.442695
      %v889 = vpow.pop %v888
      %v890 = vmul.f32 %v863, 1.442695
      %v891 = vpow.pop %v890
      %v892 = vmul.f32 %v864, 1.442695
      %v893 = vpow.pop %v892
      %v894 = vmul.f32 %v865, 1.442695
      %v895 = vpow.pop %v894
      %v896 = vmul.f32 %v866, 1.442695
      %v897 = vpow.pop %v896
      %v898 = vmul.f32 %v867, 1.442695
      %v899 = vpow.pop %v898
      %v900 = vadd.f32 %v869, %v871
      %v901 = vadd.f32 %v900, %v873
      %v902 = vadd.f32 %v901, %v875
      %v903 = vadd.f32 %v902, %v877
      %v904 = vadd.f32 %v903, %v879
      %v905 = vadd.f32 %v904, %v881
      %v906 = vadd.f32 %v905, %v883
      %v907 = vadd.f32 %v906, %v885
      %v908 = vadd.f32 %v907, %v887
      %v909 = vadd.f32 %v908, %v889
      %v910 = vadd.f32 %v909, %v891
      %v911 = vadd.f32 %v910, %v893
      %v912 = vadd.f32 %v911, %v895
      %v913 = vadd.f32 %v912, %v897
      %v914 = vadd.f32 %v913, %v899
      %v915 = vrot.slane %v914, 4
      %v916 = vadd.f32 %v914, %v915
      %v917 = vrot.slane %v916, 2
      %v918 = vadd.f32 %v916, %v917
      %v919 = vrot.slane %v918, 1
      %v920 = vadd.f32 %v918, %v919
      %921 = vmatprep.subr.mxu0 0.0
      %922 = vmatpush1.msra.mxu0 %v869
      %923 = vmatprep.subr.mxu0 0.0
      %924 = vmatpush1.msra.mxu0 %v871
      %925 = vmatprep.subr.mxu0 0.0
      %926 = vmatpush1.msra.mxu0 %v873
      %927 = vmatprep.subr.mxu0 0.0
      %928 = vmatpush1.msra.mxu0 %v875
      %929 = vmatprep.subr.mxu0 0.0
      %930 = vmatpush1.msra.mxu0 %v877
      %931 = vmatprep.subr.mxu0 0.0
      %932 = vmatpush1.msra.mxu0 %v879
      %933 = vmatprep.subr.mxu0 0.0
      %934 = vmatpush1.msra.mxu0 %v881
      %935 = vmatprep.subr.mxu0 0.0
      %936 = vmatpush1.msra.mxu0 %v883
      %937 = vmatprep.subr.mxu0 0.0
      %938 = vmatpush1.msra.mxu0 %v885
      %939 = vmatprep.subr.mxu0 0.0
      %940 = vmatpush1.msra.mxu0 %v887
      %941 = vmatprep.subr.mxu0 0.0
      %942 = vmatpush1.msra.mxu0 %v889
      %943 = vmatprep.subr.mxu0 0.0
      %944 = vmatpush1.msra.mxu0 %v891
      %945 = vmatprep.subr.mxu0 0.0
      %946 = vmatpush1.msra.mxu0 %v893
      %947 = vmatprep.subr.mxu0 0.0
      %948 = vmatpush1.msra.mxu0 %v895
      %949 = vmatprep.subr.mxu0 0.0
      %950 = vmatpush1.msra.mxu0 %v897
      %951 = vmatprep.subr.mxu0 0.0
      %952 = vmatpush1.msra.mxu0 %v899
      %953 = vmatprep.subr.mxu0 0.0
      %954 = vmatpush1.msra.mxu0 0.0
      %955 = vmatprep.subr.mxu0 0.0
      %956 = vmatpush1.msra.mxu0 0.0
      %957 = vmatprep.subr.mxu0 0.0
      %958 = vmatpush1.msra.mxu0 0.0
      %959 = vmatprep.subr.mxu0 0.0
      %960 = vmatpush1.msra.mxu0 0.0
      %961 = vmatprep.subr.mxu0 0.0
      %962 = vmatpush1.msra.mxu0 0.0
      %963 = vmatprep.subr.mxu0 0.0
      %964 = vmatpush1.msra.mxu0 0.0
      %965 = vmatprep.subr.mxu0 0.0
      %966 = vmatpush1.msra.mxu0 0.0
      %967 = vmatprep.subr.mxu0 0.0
      %968 = vmatpush1.msra.mxu0 0.0
      %969 = vmatprep.subr.mxu0 0.0
      %970 = vmatpush1.msra.mxu0 0.0
      %971 = vmatprep.subr.mxu0 0.0
      %972 = vmatpush1.msra.mxu0 0.0
      %973 = vmatprep.subr.mxu0 0.0
      %974 = vmatpush1.msra.mxu0 0.0
      %975 = vmatprep.subr.mxu0 0.0
      %976 = vmatpush1.msra.mxu0 0.0
      %977 = vmatprep.subr.mxu0 0.0
      %978 = vmatpush1.msra.mxu0 0.0
      %979 = vmatprep.subr.mxu0 0.0
      %980 = vmatpush1.msra.mxu0 0.0
      %981 = vmatprep.subr.mxu0 0.0
      %982 = vmatpush1.msra.mxu0 0.0
      %983 = vmatprep.subr.mxu0 0.0
      %984 = vmatpush1.msra.mxu0 0.0
      %985 = vmatprep.mubr.f32.mxu0 0.0
      %986 = vmatmul.mubr.f32.gmra.mrb[0].mxu0 %v604
      %v987 = vpop.f32.mrb[0].mxu0
      %v988 = vadd.f32 0.0, %v987
      %v989 = vpop.f32.mrb[0].mxu0
      %990 = vdwg.mxu0
      %v991 = vrcp.pop %v920
      %v992 = vmul.f32 %v988, %v991
      %993 = vst [vmem:[#allocation3] sm:$0xff] %v992
      %s994 = sadd.s32 0, 8
      %s995 = scalar_lea.vmem [#allocation2], %s994
      %v996 = vld [vmem:[%s995] sm:$0xff]
      %s997 = sadd.s32 8, 32
      %s998 = scalar_lea.vmem [#allocation2], %s997
      %v999 = vld [vmem:[%s998] sm:$0xff]
      %s1000 = sadd.s32 8, 64
      %s1001 = scalar_lea.vmem [#allocation2], %s1000
      %v1002 = vld [vmem:[%s1001] sm:$0xff]
      %1003 = vxpose.xlu0.b32.start [1/16] %v999, 128
      %1004 = vxpose.xlu0.b32.cont [2/16] 0.0, 128
      %1005 = vxpose.xlu0.b32.cont [3/16] 0.0, 128
      %1006 = vxpose.xlu0.b32.cont [4/16] 0.0, 128
      %1007 = vxpose.xlu0.b32.cont [5/16] 0.0, 128
      %1008 = vxpose.xlu0.b32.cont [6/16] 0.0, 128
      %1009 = vxpose.xlu0.b32.cont [7/16] 0.0, 128
      %1010 = vxpose.xlu0.b32.cont [8/16] 0.0, 128
      %1011 = vxpose.xlu0.b32.cont [9/16] 0.0, 128
      %1012 = vxpose.xlu0.b32.cont [10/16] 0.0, 128
      %1013 = vxpose.xlu0.b32.cont [11/16] 0.0, 128
      %1014 = vxpose.xlu0.b32.cont [12/16] 0.0, 128
      %1015 = vxpose.xlu0.b32.cont [13/16] 0.0, 128
      %1016 = vxpose.xlu0.b32.cont [14/16] 0.0, 128
      %1017 = vxpose.xlu0.b32.cont [15/16] 0.0, 128
      %1018 = vxpose.xlu0.b32.end [16/16] 0.0, 128
      %v1019 = vpop.trf.xlu0
      %v1020 = vpop.trf.xlu0
      %v1021 = vpop.trf.xlu0
      %v1022 = vpop.trf.xlu0
      %v1023 = vpop.trf.xlu0
      %v1024 = vpop.trf.xlu0
      %v1025 = vpop.trf.xlu0
      %v1026 = vpop.trf.xlu0
      %v1027 = vpop.trf.xlu0
      %v1028 = vpop.trf.xlu0
      %v1029 = vpop.trf.xlu0
      %v1030 = vpop.trf.xlu0
      %v1031 = vpop.trf.xlu0
      %v1032 = vpop.trf.xlu0
      %v1033 = vpop.trf.xlu0
      %v1034 = vpop.trf.xlu0
      %v1036 = vsel %vm637, %v1019, 0
      %v1039 = vsel %vm637, %v1020, 0
      %v1042 = vsel %vm637, %v1021, 0
      %v1045 = vsel %vm637, %v1022, 0
      %v1048 = vsel %vm637, %v1023, 0
      %v1051 = vsel %vm637, %v1024, 0
      %v1054 = vsel %vm637, %v1025, 0
      %v1057 = vsel %vm637, %v1026, 0
      %v1060 = vsel %vm637, %v1027, 0
      %v1063 = vsel %vm637, %v1028, 0
      %v1066 = vsel %vm637, %v1029, 0
      %v1069 = vsel %vm637, %v1030, 0
      %v1072 = vsel %vm637, %v1031, 0
      %v1075 = vsel %vm637, %v1032, 0
      %v1078 = vsel %vm637, %v1033, 0
      %v1081 = vsel %vm637, %v1034, 0
      %1083 = vmatprep.subr.mxu0 0.0
      %1084 = vmatpush1.msra.mxu0 %v996
      %1085 = vmatprep.subr.mxu0 0.0
      %1086 = vmatpush1.msra.mxu0 0.0
      %1087 = vmatprep.subr.mxu0 0.0
      %1088 = vmatpush1.msra.mxu0 0.0
      %1089 = vmatprep.subr.mxu0 0.0
      %1090 = vmatpush1.msra.mxu0 0.0
      %1091 = vmatprep.subr.mxu0 0.0
      %1092 = vmatpush1.msra.mxu0 0.0
      %1093 = vmatprep.subr.mxu0 0.0
      %1094 = vmatpush1.msra.mxu0 0.0
      %1095 = vmatprep.subr.mxu0 0.0
      %1096 = vmatpush1.msra.mxu0 0.0
      %1097 = vmatprep.subr.mxu0 0.0
      %1098 = vmatpush1.msra.mxu0 0.0
      %1099 = vmatprep.subr.mxu0 0.0
      %1100 = vmatpush1.msra.mxu0 0.0
      %1101 = vmatprep.subr.mxu0 0.0
      %1102 = vmatpush1.msra.mxu0 0.0
      %1103 = vmatprep.subr.mxu0 0.0
      %1104 = vmatpush1.msra.mxu0 0.0
      %1105 = vmatprep.subr.mxu0 0.0
      %1106 = vmatpush1.msra.mxu0 0.0
      %1107 = vmatprep.subr.mxu0 0.0
      %1108 = vmatpush1.msra.mxu0 0.0
      %1109 = vmatprep.subr.mxu0 0.0
      %1110 = vmatpush1.msra.mxu0 0.0
      %1111 = vmatprep.subr.mxu0 0.0
      %1112 = vmatpush1.msra.mxu0 0.0
      %1113 = vmatprep.subr.mxu0 0.0
      %1114 = vmatpush1.msra.mxu0 0.0
      %1115 = vmatprep.subr.mxu0 0.0
      %1116 = vmatpush1.msra.mxu0 0.0
      %1117 = vmatprep.subr.mxu0 0.0
      %1118 = vmatpush1.msra.mxu0 0.0
      %1119 = vmatprep.subr.mxu0 0.0
      %1120 = vmatpush1.msra.mxu0 0.0
      %1121 = vmatprep.subr.mxu0 0.0
      %1122 = vmatpush1.msra.mxu0 0.0
      %1123 = vmatprep.subr.mxu0 0.0
      %1124 = vmatpush1.msra.mxu0 0.0
      %1125 = vmatprep.subr.mxu0 0.0
      %1126 = vmatpush1.msra.mxu0 0.0
      %1127 = vmatprep.subr.mxu0 0.0
      %1128 = vmatpush1.msra.mxu0 0.0
      %1129 = vmatprep.subr.mxu0 0.0
      %1130 = vmatpush1.msra.mxu0 0.0
      %1131 = vmatprep.subr.mxu0 0.0
      %1132 = vmatpush1.msra.mxu0 0.0
      %1133 = vmatprep.subr.mxu0 0.0
      %1134 = vmatpush1.msra.mxu0 0.0
      %1135 = vmatprep.subr.mxu0 0.0
      %1136 = vmatpush1.msra.mxu0 0.0
      %1137 = vmatprep.subr.mxu0 0.0
      %1138 = vmatpush1.msra.mxu0 0.0
      %1139 = vmatprep.subr.mxu0 0.0
      %1140 = vmatpush1.msra.mxu0 0.0
      %1141 = vmatprep.subr.mxu0 0.0
      %1142 = vmatpush1.msra.mxu0 0.0
      %1143 = vmatprep.subr.mxu0 0.0
      %1144 = vmatpush1.msra.mxu0 0.0
      %1145 = vmatprep.subr.mxu0 0.0
      %1146 = vmatpush1.msra.mxu0 0.0
      %1147 = vmatprep.mubr.f32.mxu0 0.0
      %1148 = vmatmul.mubr.f32.gmra.mrb[0].mxu0 %v1036
      %v1149 = vpop.f32.mrb[0].mxu0
      %v1150 = vadd.f32 %v580, %v1149
      %v1151 = vpop.f32.mrb[0].mxu0
      %1152 = vmatprep.mubr.f32.mxu0 0.0
      %1153 = vmatmul.mubr.f32.gmra.mrb[0].mxu0 %v1039
      %v1154 = vpop.f32.mrb[0].mxu0
      %v1155 = vadd.f32 %v581, %v1154
      %v1156 = vpop.f32.mrb[0].mxu0
      %1157 = vmatprep.mubr.f32.mxu0 0.0
      %1158 = vmatmul.mubr.f32.gmra.mrb[0].mxu0 %v1042
      %v1159 = vpop.f32.mrb[0].mxu0
      %v1160 = vadd.f32 %v582, %v1159
      %v1161 = vpop.f32.mrb[0].mxu0
      %1162 = vmatprep.mubr.f32.mxu0 0.0
      %1163 = vmatmul.mubr.f32.gmra.mrb[0].mxu0 %v1045
      %v1164 = vpop.f32.mrb[0].mxu0
      %v1165 = vadd.f32 %v583, %v1164
      %v1166 = vpop.f32.mrb[0].mxu0
      %1167 = vmatprep.mubr.f32.mxu0 0.0
      %1168 = vmatmul.mubr.f32.gmra.mrb[0].mxu0 %v1048
      %v1169 = vpop.f32.mrb[0].mxu0
      %v1170 = vadd.f32 %v584, %v1169
      %v1171 = vpop.f32.mrb[0].mxu0
      %1172 = vmatprep.mubr.f32.mxu0 0.0
      %1173 = vmatmul.mubr.f32.gmra.mrb[0].mxu0 %v1051
      %v1174 = vpop.f32.mrb[0].mxu0
      %v1175 = vadd.f32 %v585, %v1174
      %v1176 = vpop.f32.mrb[0].mxu0
      %1177 = vmatprep.mubr.f32.mxu0 0.0
      %1178 = vmatmul.mubr.f32.gmra.mrb[0].mxu0 %v1054
      %v1179 = vpop.f32.mrb[0].mxu0
      %v1180 = vadd.f32 %v586, %v1179
      %v1181 = vpop.f32.mrb[0].mxu0
      %1182 = vmatprep.mubr.f32.mxu0 0.0
      %1183 = vmatmul.mubr.f32.gmra.mrb[0].mxu0 %v1057
      %v1184 = vpop.f32.mrb[0].mxu0
      %v1185 = vadd.f32 %v587, %v1184
      %v1186 = vpop.f32.mrb[0].mxu0
      %1187 = vmatprep.mubr.f32.mxu0 0.0
      %1188 = vmatmul.mubr.f32.gmra.mrb[0].mxu0 %v1060
      %v1189 = vpop.f32.mrb[0].mxu0
      %v1190 = vadd.f32 %v588, %v1189
      %v1191 = vpop.f32.mrb[0].mxu0
      %1192 = vmatprep.mubr.f32.mxu0 0.0
      %1193 = vmatmul.mubr.f32.gmra.mrb[0].mxu0 %v1063
      %v1194 = vpop.f32.mrb[0].mxu0
      %v1195 = vadd.f32 %v589, %v1194
      %v1196 = vpop.f32.mrb[0].mxu0
      %1197 = vmatprep.mubr.f32.mxu0 0.0
      %1198 = vmatmul.mubr.f32.gmra.mrb[0].mxu0 %v1066
      %v1199 = vpop.f32.mrb[0].mxu0
      %v1200 = vadd.f32 %v590, %v1199
      %v1201 = vpop.f32.mrb[0].mxu0
      %1202 = vmatprep.mubr.f32.mxu0 0.0
      %1203 = vmatmul.mubr.f32.gmra.mrb[0].mxu0 %v1069
      %v1204 = vpop.f32.mrb[0].mxu0
      %v1205 = vadd.f32 %v591, %v1204
      %v1206 = vpop.f32.mrb[0].mxu0
      %1207 = vmatprep.mubr.f32.mxu0 0.0
      %1208 = vmatmul.mubr.f32.gmra.mrb[0].mxu0 %v1072
      %v1209 = vpop.f32.mrb[0].mxu0
      %v1210 = vadd.f32 %v592, %v1209
      %v1211 = vpop.f32.mrb[0].mxu0
      %1212 = vmatprep.mubr.f32.mxu0 0.0
      %1213 = vmatmul.mubr.f32.gmra.mrb[0].mxu0 %v1075
      %v1214 = vpop.f32.mrb[0].mxu0
      %v1215 = vadd.f32 %v593, %v1214
      %v1216 = vpop.f32.mrb[0].mxu0
      %1217 = vmatprep.mubr.f32.mxu0 0.0
      %1218 = vmatmul.mubr.f32.gmra.mrb[0].mxu0 %v1078
      %v1219 = vpop.f32.mrb[0].mxu0
      %v1220 = vadd.f32 %v594, %v1219
      %v1221 = vpop.f32.mrb[0].mxu0
      %1222 = vmatprep.mubr.f32.mxu0 0.0
      %1223 = vmatmul.mubr.f32.gmra.mrb[0].mxu0 %v1081
      %v1224 = vpop.f32.mrb[0].mxu0
      %v1225 = vadd.f32 %v595, %v1224
      %v1226 = vpop.f32.mrb[0].mxu0
      %1227 = vdwg.mxu0
      %v1228 = vmax.f32 %v1150, %v1170
      %v1229 = vmax.f32 %v1155, %v1175
      %v1230 = vmax.f32 %v1160, %v1180
      %v1231 = vmax.f32 %v1165, %v1185
      %v1232 = vmax.f32 %v1228, %v1190
      %v1233 = vmax.f32 %v1229, %v1195
      %v1234 = vmax.f32 %v1230, %v1200
      %v1235 = vmax.f32 %v1231, %v1205
      %v1236 = vmax.f32 %v1232, %v1210
      %v1237 = vmax.f32 %v1233, %v1215
      %v1238 = vmax.f32 %v1234, %v1220
      %v1239 = vmax.f32 %v1235, %v1225
      %v1240 = vmax.f32 %v1236, %v1237
      %v1241 = vmax.f32 %v1238, %v1239
      %v1242 = vmax.f32 %v1240, %v1241
      %v1243 = vrot.slane %v1242, 4
      %v1244 = vmax.f32 %v1242, %v1243
      %v1245 = vrot.slane %v1244, 2
      %v1246 = vmax.f32 %v1244, %v1245
      %v1247 = vrot.slane %v1246, 1
      %v1248 = vmax.f32 %v1246, %v1247
      %v1249 = vsub.f32 %v1150, %v1248
      %v1250 = vsub.f32 %v1155, %v1248
      %v1251 = vsub.f32 %v1160, %v1248
      %v1252 = vsub.f32 %v1165, %v1248
      %v1253 = vsub.f32 %v1170, %v1248
      %v1254 = vsub.f32 %v1175, %v1248
      %v1255 = vsub.f32 %v1180, %v1248
      %v1256 = vsub.f32 %v1185, %v1248
      %v1257 = vsub.f32 %v1190, %v1248
      %v1258 = vsub.f32 %v1195, %v1248
      %v1259 = vsub.f32 %v1200, %v1248
      %v1260 = vsub.f32 %v1205, %v1248
      %v1261 = vsub.f32 %v1210, %v1248
      %v1262 = vsub.f32 %v1215, %v1248
      %v1263 = vsub.f32 %v1220, %v1248
      %v1264 = vsub.f32 %v1225, %v1248
      %v1265 = vmul.f32 %v1249, 1.442695
      %v1266 = vpow.pop %v1265
      %v1267 = vmul.f32 %v1250, 1.442695
      %v1268 = vpow.pop %v1267
      %v1269 = vmul.f32 %v1251, 1.442695
      %v1270 = vpow.pop %v1269
      %v1271 = vmul.f32 %v1252, 1.442695
      %v1272 = vpow.pop %v1271
      %v1273 = vmul.f32 %v1253, 1.442695
      %v1274 = vpow.pop %v1273
      %v1275 = vmul.f32 %v1254, 1.442695
      %v1276 = vpow.pop %v1275
      %v1277 = vmul.f32 %v1255, 1.442695
      %v1278 = vpow.pop %v1277
      %v1279 = vmul.f32 %v1256, 1.442695
      %v1280 = vpow.pop %v1279
      %v1281 = vmul.f32 %v1257, 1.442695
      %v1282 = vpow.pop %v1281
      %v1283 = vmul.f32 %v1258, 1.442695
      %v1284 = vpow.pop %v1283
      %v1285 = vmul.f32 %v1259, 1.442695
      %v1286 = vpow.pop %v1285
      %v1287 = vmul.f32 %v1260, 1.442695
      %v1288 = vpow.pop %v1287
      %v1289 = vmul.f32 %v1261, 1.442695
      %v1290 = vpow.pop %v1289
      %v1291 = vmul.f32 %v1262, 1.442695
      %v1292 = vpow.pop %v1291
      %v1293 = vmul.f32 %v1263, 1.442695
      %v1294 = vpow.pop %v1293
      %v1295 = vmul.f32 %v1264, 1.442695
      %v1296 = vpow.pop %v1295
      %v1297 = vadd.f32 %v1266, %v1268
      %v1298 = vadd.f32 %v1297, %v1270
      %v1299 = vadd.f32 %v1298, %v1272
      %v1300 = vadd.f32 %v1299, %v1274
      %v1301 = vadd.f32 %v1300, %v1276
      %v1302 = vadd.f32 %v1301, %v1278
      %v1303 = vadd.f32 %v1302, %v1280
      %v1304 = vadd.f32 %v1303, %v1282
      %v1305 = vadd.f32 %v1304, %v1284
      %v1306 = vadd.f32 %v1305, %v1286
      %v1307 = vadd.f32 %v1306, %v1288
      %v1308 = vadd.f32 %v1307, %v1290
      %v1309 = vadd.f32 %v1308, %v1292
      %v1310 = vadd.f32 %v1309, %v1294
      %v1311 = vadd.f32 %v1310, %v1296
      %v1312 = vrot.slane %v1311, 4
      %v1313 = vadd.f32 %v1311, %v1312
      %v1314 = vrot.slane %v1313, 2
      %v1315 = vadd.f32 %v1313, %v1314
      %v1316 = vrot.slane %v1315, 1
      %v1317 = vadd.f32 %v1315, %v1316
      %1318 = vmatprep.subr.mxu0 0.0
      %1319 = vmatpush1.msra.mxu0 %v1266
      %1320 = vmatprep.subr.mxu0 0.0
      %1321 = vmatpush1.msra.mxu0 %v1268
      %1322 = vmatprep.subr.mxu0 0.0
      %1323 = vmatpush1.msra.mxu0 %v1270
      %1324 = vmatprep.subr.mxu0 0.0
      %1325 = vmatpush1.msra.mxu0 %v1272
      %1326 = vmatprep.subr.mxu0 0.0
      %1327 = vmatpush1.msra.mxu0 %v1274
      %1328 = vmatprep.subr.mxu0 0.0
      %1329 = vmatpush1.msra.mxu0 %v1276
      %1330 = vmatprep.subr.mxu0 0.0
      %1331 = vmatpush1.msra.mxu0 %v1278
      %1332 = vmatprep.subr.mxu0 0.0
      %1333 = vmatpush1.msra.mxu0 %v1280
      %1334 = vmatprep.subr.mxu0 0.0
      %1335 = vmatpush1.msra.mxu0 %v1282
      %1336 = vmatprep.subr.mxu0 0.0
      %1337 = vmatpush1.msra.mxu0 %v1284
      %1338 = vmatprep.subr.mxu0 0.0
      %1339 = vmatpush1.msra.mxu0 %v1286
      %1340 = vmatprep.subr.mxu0 0.0
      %1341 = vmatpush1.msra.mxu0 %v1288
      %1342 = vmatprep.subr.mxu0 0.0
      %1343 = vmatpush1.msra.mxu0 %v1290
      %1344 = vmatprep.subr.mxu0 0.0
      %1345 = vmatpush1.msra.mxu0 %v1292
      %1346 = vmatprep.subr.mxu0 0.0
      %1347 = vmatpush1.msra.mxu0 %v1294
      %1348 = vmatprep.subr.mxu0 0.0
      %1349 = vmatpush1.msra.mxu0 %v1296
      %1350 = vmatprep.subr.mxu0 0.0
      %1351 = vmatpush1.msra.mxu0 0.0
      %1352 = vmatprep.subr.mxu0 0.0
      %1353 = vmatpush1.msra.mxu0 0.0
      %1354 = vmatprep.subr.mxu0 0.0
      %1355 = vmatpush1.msra.mxu0 0.0
      %1356 = vmatprep.subr.mxu0 0.0
      %1357 = vmatpush1.msra.mxu0 0.0
      %1358 = vmatprep.subr.mxu0 0.0
      %1359 = vmatpush1.msra.mxu0 0.0
      %1360 = vmatprep.subr.mxu0 0.0
      %1361 = vmatpush1.msra.mxu0 0.0
      %1362 = vmatprep.subr.mxu0 0.0
      %1363 = vmatpush1.msra.mxu0 0.0
      %1364 = vmatprep.subr.mxu0 0.0
      %1365 = vmatpush1.msra.mxu0 0.0
      %1366 = vmatprep.subr.mxu0 0.0
      %1367 = vmatpush1.msra.mxu0 0.0
      %1368 = vmatprep.subr.mxu0 0.0
      %1369 = vmatpush1.msra.mxu0 0.0
      %1370 = vmatprep.subr.mxu0 0.0
      %1371 = vmatpush1.msra.mxu0 0.0
      %1372 = vmatprep.subr.mxu0 0.0
      %1373 = vmatpush1.msra.mxu0 0.0
      %1374 = vmatprep.subr.mxu0 0.0
      %1375 = vmatpush1.msra.mxu0 0.0
      %1376 = vmatprep.subr.mxu0 0.0
      %1377 = vmatpush1.msra.mxu0 0.0
      %1378 = vmatprep.subr.mxu0 0.0
      %1379 = vmatpush1.msra.mxu0 0.0
      %1380 = vmatprep.subr.mxu0 0.0
      %1381 = vmatpush1.msra.mxu0 0.0
      %1382 = vmatprep.mubr.f32.mxu0 0.0
      %1383 = vmatmul.mubr.f32.gmra.mrb[0].mxu0 %v1002
      %v1384 = vpop.f32.mrb[0].mxu0
      %v1385 = vadd.f32 0.0, %v1384
      %v1386 = vpop.f32.mrb[0].mxu0
      %1387 = vdwg.mxu0
      %v1388 = vrcp.pop %v1317
      %v1389 = vmul.f32 %v1385, %v1388
      %s1390 = scalar_lea.vmem [#allocation3], 8
      %1391 = vst [vmem:[%s1390] sm:$0xff] %v1389
      %s1392 = sadd.s32 0, 16
      %s1393 = scalar_lea.vmem [#allocation2], %s1392
      %v1394 = vld [vmem:[%s1393] sm:$0xff]
      %s1395 = sadd.s32 16, 32
      %s1396 = scalar_lea.vmem [#allocation2], %s1395
      %v1397 = vld [vmem:[%s1396] sm:$0xff]
      %s1398 = sadd.s32 16, 64
      %s1399 = scalar_lea.vmem [#allocation2], %s1398
      %v1400 = vld [vmem:[%s1399] sm:$0xff]
      %1401 = vxpose.xlu0.b32.start [1/16] %v1397, 128
      %1402 = vxpose.xlu0.b32.cont [2/16] 0.0, 128
      %1403 = vxpose.xlu0.b32.cont [3/16] 0.0, 128
      %1404 = vxpose.xlu0.b32.cont [4/16] 0.0, 128
      %1405 = vxpose.xlu0.b32.cont [5/16] 0.0, 128
      %1406 = vxpose.xlu0.b32.cont [6/16] 0.0, 128
      %1407 = vxpose.xlu0.b32.cont [7/16] 0.0, 128
      %1408 = vxpose.xlu0.b32.cont [8/16] 0.0, 128
      %1409 = vxpose.xlu0.b32.cont [9/16] 0.0, 128
      %1410 = vxpose.xlu0.b32.cont [10/16] 0.0, 128
      %1411 = vxpose.xlu0.b32.cont [11/16] 0.0, 128
      %1412 = vxpose.xlu0.b32.cont [12/16] 0.0, 128
      %1413 = vxpose.xlu0.b32.cont [13/16] 0.0, 128
      %1414 = vxpose.xlu0.b32.cont [14/16] 0.0, 128
      %1415 = vxpose.xlu0.b32.cont [15/16] 0.0, 128
      %1416 = vxpose.xlu0.b32.end [16/16] 0.0, 128
      %v1417 = vpop.trf.xlu0
      %v1418 = vpop.trf.xlu0
      %v1419 = vpop.trf.xlu0
      %v1420 = vpop.trf.xlu0
      %v1421 = vpop.trf.xlu0
      %v1422 = vpop.trf.xlu0
      %v1423 = vpop.trf.xlu0
      %v1424 = vpop.trf.xlu0
      %v1425 = vpop.trf.xlu0
      %v1426 = vpop.trf.xlu0
      %v1427 = vpop.trf.xlu0
      %v1428 = vpop.trf.xlu0
      %v1429 = vpop.trf.xlu0
      %v1430 = vpop.trf.xlu0
      %v1431 = vpop.trf.xlu0
      %v1432 = vpop.trf.xlu0
      %v1434 = vsel %vm637, %v1417, 0
      %v1437 = vsel %vm637, %v1418, 0
      %v1440 = vsel %vm637, %v1419, 0
      %v1443 = vsel %vm637, %v1420, 0
      %v1446 = vsel %vm637, %v1421, 0
      %v1449 = vsel %vm637, %v1422, 0
      %v1452 = vsel %vm637, %v1423, 0
      %v1455 = vsel %vm637, %v1424, 0
      %v1458 = vsel %vm637, %v1425, 0
      %v1461 = vsel %vm637, %v1426, 0
      %v1464 = vsel %vm637, %v1427, 0
      %v1467 = vsel %vm637, %v1428, 0
      %v1470 = vsel %vm637, %v1429, 0
      %v1473 = vsel %vm637, %v1430, 0
      %v1476 = vsel %vm637, %v1431, 0
      %v1479 = vsel %vm637, %v1432, 0
      %1481 = vmatprep.subr.mxu0 0.0
      %1482 = vmatpush1.msra.mxu0 %v1394
      %1483 = vmatprep.subr.mxu0 0.0
      %1484 = vmatpush1.msra.mxu0 0.0
      %1485 = vmatprep.subr.mxu0 0.0
      %1486 = vmatpush1.msra.mxu0 0.0
      %1487 = vmatprep.subr.mxu0 0.0
      %1488 = vmatpush1.msra.mxu0 0.0
      %1489 = vmatprep.subr.mxu0 0.0
      %1490 = vmatpush1.msra.mxu0 0.0
      %1491 = vmatprep.subr.mxu0 0.0
      %1492 = vmatpush1.msra.mxu0 0.0
      %1493 = vmatprep.subr.mxu0 0.0
      %1494 = vmatpush1.msra.mxu0 0.0
      %1495 = vmatprep.subr.mxu0 0.0
      %1496 = vmatpush1.msra.mxu0 0.0
      %1497 = vmatprep.subr.mxu0 0.0
      %1498 = vmatpush1.msra.mxu0 0.0
      %1499 = vmatprep.subr.mxu0 0.0
      %1500 = vmatpush1.msra.mxu0 0.0
      %1501 = vmatprep.subr.mxu0 0.0
      %1502 = vmatpush1.msra.mxu0 0.0
      %1503 = vmatprep.subr.mxu0 0.0
      %1504 = vmatpush1.msra.mxu0 0.0
      %1505 = vmatprep.subr.mxu0 0.0
      %1506 = vmatpush1.msra.mxu0 0.0
      %1507 = vmatprep.subr.mxu0 0.0
      %1508 = vmatpush1.msra.mxu0 0.0
      %1509 = vmatprep.subr.mxu0 0.0
      %1510 = vmatpush1.msra.mxu0 0.0
      %1511 = vmatprep.subr.mxu0 0.0
      %1512 = vmatpush1.msra.mxu0 0.0
      %1513 = vmatprep.subr.mxu0 0.0
      %1514 = vmatpush1.msra.mxu0 0.0
      %1515 = vmatprep.subr.mxu0 0.0
      %1516 = vmatpush1.msra.mxu0 0.0
      %1517 = vmatprep.subr.mxu0 0.0
      %1518 = vmatpush1.msra.mxu0 0.0
      %1519 = vmatprep.subr.mxu0 0.0
      %1520 = vmatpush1.msra.mxu0 0.0
      %1521 = vmatprep.subr.mxu0 0.0
      %1522 = vmatpush1.msra.mxu0 0.0
      %1523 = vmatprep.subr.mxu0 0.0
      %1524 = vmatpush1.msra.mxu0 0.0
      %1525 = vmatprep.subr.mxu0 0.0
      %1526 = vmatpush1.msra.mxu0 0.0
      %1527 = vmatprep.subr.mxu0 0.0
      %1528 = vmatpush1.msra.mxu0 0.0
      %1529 = vmatprep.subr.mxu0 0.0
      %1530 = vmatpush1.msra.mxu0 0.0
      %1531 = vmatprep.subr.mxu0 0.0
      %1532 = vmatpush1.msra.mxu0 0.0
      %1533 = vmatprep.subr.mxu0 0.0
      %1534 = vmatpush1.msra.mxu0 0.0
      %1535 = vmatprep.subr.mxu0 0.0
      %1536 = vmatpush1.msra.mxu0 0.0
      %1537 = vmatprep.subr.mxu0 0.0
      %1538 = vmatpush1.msra.mxu0 0.0
      %1539 = vmatprep.subr.mxu0 0.0
      %1540 = vmatpush1.msra.mxu0 0.0
      %1541 = vmatprep.subr.mxu0 0.0
      %1542 = vmatpush1.msra.mxu0 0.0
      %1543 = vmatprep.subr.mxu0 0.0
      %1544 = vmatpush1.msra.mxu0 0.0
      %1545 = vmatprep.mubr.f32.mxu0 0.0
      %1546 = vmatmul.mubr.f32.gmra.mrb[0].mxu0 %v1434
      %v1547 = vpop.f32.mrb[0].mxu0
      %v1548 = vadd.f32 %v580, %v1547
      %v1549 = vpop.f32.mrb[0].mxu0
      %1550 = vmatprep.mubr.f32.mxu0 0.0
      %1551 = vmatmul.mubr.f32.gmra.mrb[0].mxu0 %v1437
      %v1552 = vpop.f32.mrb[0].mxu0
      %v1553 = vadd.f32 %v581, %v1552
      %v1554 = vpop.f32.mrb[0].mxu0
      %1555 = vmatprep.mubr.f32.mxu0 0.0
      %1556 = vmatmul.mubr.f32.gmra.mrb[0].mxu0 %v1440
      %v1557 = vpop.f32.mrb[0].mxu0
      %v1558 = vadd.f32 %v582, %v1557
      %v1559 = vpop.f32.mrb[0].mxu0
      %1560 = vmatprep.mubr.f32.mxu0 0.0
      %1561 = vmatmul.mubr.f32.gmra.mrb[0].mxu0 %v1443
      %v1562 = vpop.f32.mrb[0].mxu0
      %v1563 = vadd.f32 %v583, %v1562
      %v1564 = vpop.f32.mrb[0].mxu0
      %1565 = vmatprep.mubr.f32.mxu0 0.0
      %1566 = vmatmul.mubr.f32.gmra.mrb[0].mxu0 %v1446
      %v1567 = vpop.f32.mrb[0].mxu0
      %v1568 = vadd.f32 %v584, %v1567
      %v1569 = vpop.f32.mrb[0].mxu0
      %1570 = vmatprep.mubr.f32.mxu0 0.0
      %1571 = vmatmul.mubr.f32.gmra.mrb[0].mxu0 %v1449
      %v1572 = vpop.f32.mrb[0].mxu0
      %v1573 = vadd.f32 %v585, %v1572
      %v1574 = vpop.f32.mrb[0].mxu0
      %1575 = vmatprep.mubr.f32.mxu0 0.0
      %1576 = vmatmul.mubr.f32.gmra.mrb[0].mxu0 %v1452
      %v1577 = vpop.f32.mrb[0].mxu0
      %v1578 = vadd.f32 %v586, %v1577
      %v1579 = vpop.f32.mrb[0].mxu0
      %1580 = vmatprep.mubr.f32.mxu0 0.0
      %1581 = vmatmul.mubr.f32.gmra.mrb[0].mxu0 %v1455
      %v1582 = vpop.f32.mrb[0].mxu0
      %v1583 = vadd.f32 %v587, %v1582
      %v1584 = vpop.f32.mrb[0].mxu0
      %1585 = vmatprep.mubr.f32.mxu0 0.0
      %1586 = vmatmul.mubr.f32.gmra.mrb[0].mxu0 %v1458
      %v1587 = vpop.f32.mrb[0].mxu0
      %v1588 = vadd.f32 %v588, %v1587
      %v1589 = vpop.f32.mrb[0].mxu0
      %1590 = vmatprep.mubr.f32.mxu0 0.0
      %1591 = vmatmul.mubr.f32.gmra.mrb[0].mxu0 %v1461
      %v1592 = vpop.f32.mrb[0].mxu0
      %v1593 = vadd.f32 %v589, %v1592
      %v1594 = vpop.f32.mrb[0].mxu0
      %1595 = vmatprep.mubr.f32.mxu0 0.0
      %1596 = vmatmul.mubr.f32.gmra.mrb[0].mxu0 %v1464
      %v1597 = vpop.f32.mrb[0].mxu0
      %v1598 = vadd.f32 %v590, %v1597
      %v1599 = vpop.f32.mrb[0].mxu0
      %1600 = vmatprep.mubr.f32.mxu0 0.0
      %1601 = vmatmul.mubr.f32.gmra.mrb[0].mxu0 %v1467
      %v1602 = vpop.f32.mrb[0].mxu0
      %v1603 = vadd.f32 %v591, %v1602
      %v1604 = vpop.f32.mrb[0].mxu0
      %1605 = vmatprep.mubr.f32.mxu0 0.0
      %1606 = vmatmul.mubr.f32.gmra.mrb[0].mxu0 %v1470
      %v1607 = vpop.f32.mrb[0].mxu0
      %v1608 = vadd.f32 %v592, %v1607
      %v1609 = vpop.f32.mrb[0].mxu0
      %1610 = vmatprep.mubr.f32.mxu0 0.0
      %1611 = vmatmul.mubr.f32.gmra.mrb[0].mxu0 %v1473
      %v1612 = vpop.f32.mrb[0].mxu0
      %v1613 = vadd.f32 %v593, %v1612
      %v1614 = vpop.f32.mrb[0].mxu0
      %1615 = vmatprep.mubr.f32.mxu0 0.0
      %1616 = vmatmul.mubr.f32.gmra.mrb[0].mxu0 %v1476
      %v1617 = vpop.f32.mrb[0].mxu0
      %v1618 = vadd.f32 %v594, %v1617
      %v1619 = vpop.f32.mrb[0].mxu0
      %1620 = vmatprep.mubr.f32.mxu0 0.0
      %1621 = vmatmul.mubr.f32.gmra.mrb[0].mxu0 %v1479
      %v1622 = vpop.f32.mrb[0].mxu0
      %v1623 = vadd.f32 %v595, %v1622
      %v1624 = vpop.f32.mrb[0].mxu0
      %1625 = vdwg.mxu0
      %v1626 = vmax.f32 %v1548, %v1568
      %v1627 = vmax.f32 %v1553, %v1573
      %v1628 = vmax.f32 %v1558, %v1578
      %v1629 = vmax.f32 %v1563, %v1583
      %v1630 = vmax.f32 %v1626, %v1588
      %v1631 = vmax.f32 %v1627, %v1593
      %v1632 = vmax.f32 %v1628, %v1598
      %v1633 = vmax.f32 %v1629, %v1603
      %v1634 = vmax.f32 %v1630, %v1608
      %v1635 = vmax.f32 %v1631, %v1613
      %v1636 = vmax.f32 %v1632, %v1618
      %v1637 = vmax.f32 %v1633, %v1623
      %v1638 = vmax.f32 %v1634, %v1635
      %v1639 = vmax.f32 %v1636, %v1637
      %v1640 = vmax.f32 %v1638, %v1639
      %v1641 = vrot.slane %v1640, 4
      %v1642 = vmax.f32 %v1640, %v1641
      %v1643 = vrot.slane %v1642, 2
      %v1644 = vmax.f32 %v1642, %v1643
      %v1645 = vrot.slane %v1644, 1
      %v1646 = vmax.f32 %v1644, %v1645
      %v1647 = vsub.f32 %v1548, %v1646
      %v1648 = vsub.f32 %v1553, %v1646
      %v1649 = vsub.f32 %v1558, %v1646
      %v1650 = vsub.f32 %v1563, %v1646
      %v1651 = vsub.f32 %v1568, %v1646
      %v1652 = vsub.f32 %v1573, %v1646
      %v1653 = vsub.f32 %v1578, %v1646
      %v1654 = vsub.f32 %v1583, %v1646
      %v1655 = vsub.f32 %v1588, %v1646
      %v1656 = vsub.f32 %v1593, %v1646
      %v1657 = vsub.f32 %v1598, %v1646
      %v1658 = vsub.f32 %v1603, %v1646
      %v1659 = vsub.f32 %v1608, %v1646
      %v1660 = vsub.f32 %v1613, %v1646
      %v1661 = vsub.f32 %v1618, %v1646
      %v1662 = vsub.f32 %v1623, %v1646
      %v1663 = vmul.f32 %v1647, 1.442695
      %v1664 = vpow.pop %v1663
      %v1665 = vmul.f32 %v1648, 1.442695
      %v1666 = vpow.pop %v1665
      %v1667 = vmul.f32 %v1649, 1.442695
      %v1668 = vpow.pop %v1667
      %v1669 = vmul.f32 %v1650, 1.442695
      %v1670 = vpow.pop %v1669
      %v1671 = vmul.f32 %v1651, 1.442695
      %v1672 = vpow.pop %v1671
      %v1673 = vmul.f32 %v1652, 1.442695
      %v1674 = vpow.pop %v1673
      %v1675 = vmul.f32 %v1653, 1.442695
      %v1676 = vpow.pop %v1675
      %v1677 = vmul.f32 %v1654, 1.442695
      %v1678 = vpow.pop %v1677
      %v1679 = vmul.f32 %v1655, 1.442695
      %v1680 = vpow.pop %v1679
      %v1681 = vmul.f32 %v1656, 1.442695
      %v1682 = vpow.pop %v1681
      %v1683 = vmul.f32 %v1657, 1.442695
      %v1684 = vpow.pop %v1683
      %v1685 = vmul.f32 %v1658, 1.442695
      %v1686 = vpow.pop %v1685
      %v1687 = vmul.f32 %v1659, 1.442695
      %v1688 = vpow.pop %v1687
      %v1689 = vmul.f32 %v1660, 1.442695
      %v1690 = vpow.pop %v1689
      %v1691 = vmul.f32 %v1661, 1.442695
      %v1692 = vpow.pop %v1691
      %v1693 = vmul.f32 %v1662, 1.442695
      %v1694 = vpow.pop %v1693
      %v1695 = vadd.f32 %v1664, %v1666
      %v1696 = vadd.f32 %v1695, %v1668
      %v1697 = vadd.f32 %v1696, %v1670
      %v1698 = vadd.f32 %v1697, %v1672
      %v1699 = vadd.f32 %v1698, %v1674
      %v1700 = vadd.f32 %v1699, %v1676
      %v1701 = vadd.f32 %v1700, %v1678
      %v1702 = vadd.f32 %v1701, %v1680
      %v1703 = vadd.f32 %v1702, %v1682
      %v1704 = vadd.f32 %v1703, %v1684
      %v1705 = vadd.f32 %v1704, %v1686
      %v1706 = vadd.f32 %v1705, %v1688
      %v1707 = vadd.f32 %v1706, %v1690
      %v1708 = vadd.f32 %v1707, %v1692
      %v1709 = vadd.f32 %v1708, %v1694
      %v1710 = vrot.slane %v1709, 4
      %v1711 = vadd.f32 %v1709, %v1710
      %v1712 = vrot.slane %v1711, 2
      %v1713 = vadd.f32 %v1711, %v1712
      %v1714 = vrot.slane %v1713, 1
      %v1715 = vadd.f32 %v1713, %v1714
      %1716 = vmatprep.subr.mxu0 0.0
      %1717 = vmatpush1.msra.mxu0 %v1664
      %1718 = vmatprep.subr.mxu0 0.0
      %1719 = vmatpush1.msra.mxu0 %v1666
      %1720 = vmatprep.subr.mxu0 0.0
      %1721 = vmatpush1.msra.mxu0 %v1668
      %1722 = vmatprep.subr.mxu0 0.0
      %1723 = vmatpush1.msra.mxu0 %v1670
      %1724 = vmatprep.subr.mxu0 0.0
      %1725 = vmatpush1.msra.mxu0 %v1672
      %1726 = vmatprep.subr.mxu0 0.0
      %1727 = vmatpush1.msra.mxu0 %v1674
      %1728 = vmatprep.subr.mxu0 0.0
      %1729 = vmatpush1.msra.mxu0 %v1676
      %1730 = vmatprep.subr.mxu0 0.0
      %1731 = vmatpush1.msra.mxu0 %v1678
      %1732 = vmatprep.subr.mxu0 0.0
      %1733 = vmatpush1.msra.mxu0 %v1680
      %1734 = vmatprep.subr.mxu0 0.0
      %1735 = vmatpush1.msra.mxu0 %v1682
      %1736 = vmatprep.subr.mxu0 0.0
      %1737 = vmatpush1.msra.mxu0 %v1684
      %1738 = vmatprep.subr.mxu0 0.0
      %1739 = vmatpush1.msra.mxu0 %v1686
      %1740 = vmatprep.subr.mxu0 0.0
      %1741 = vmatpush1.msra.mxu0 %v1688
      %1742 = vmatprep.subr.mxu0 0.0
      %1743 = vmatpush1.msra.mxu0 %v1690
      %1744 = vmatprep.subr.mxu0 0.0
      %1745 = vmatpush1.msra.mxu0 %v1692
      %1746 = vmatprep.subr.mxu0 0.0
      %1747 = vmatpush1.msra.mxu0 %v1694
      %1748 = vmatprep.subr.mxu0 0.0
      %1749 = vmatpush1.msra.mxu0 0.0
      %1750 = vmatprep.subr.mxu0 0.0
      %1751 = vmatpush1.msra.mxu0 0.0
      %1752 = vmatprep.subr.mxu0 0.0
      %1753 = vmatpush1.msra.mxu0 0.0
      %1754 = vmatprep.subr.mxu0 0.0
      %1755 = vmatpush1.msra.mxu0 0.0
      %1756 = vmatprep.subr.mxu0 0.0
      %1757 = vmatpush1.msra.mxu0 0.0
      %1758 = vmatprep.subr.mxu0 0.0
      %1759 = vmatpush1.msra.mxu0 0.0
      %1760 = vmatprep.subr.mxu0 0.0
      %1761 = vmatpush1.msra.mxu0 0.0
      %1762 = vmatprep.subr.mxu0 0.0
      %1763 = vmatpush1.msra.mxu0 0.0
      %1764 = vmatprep.subr.mxu0 0.0
      %1765 = vmatpush1.msra.mxu0 0.0
      %1766 = vmatprep.subr.mxu0 0.0
      %1767 = vmatpush1.msra.mxu0 0.0
      %1768 = vmatprep.subr.mxu0 0.0
      %1769 = vmatpush1.msra.mxu0 0.0
      %1770 = vmatprep.subr.mxu0 0.0
      %1771 = vmatpush1.msra.mxu0 0.0
      %1772 = vmatprep.subr.mxu0 0.0
      %1773 = vmatpush1.msra.mxu0 0.0
      %1774 = vmatprep.subr.mxu0 0.0
      %1775 = vmatpush1.msra.mxu0 0.0
      %1776 = vmatprep.subr.mxu0 0.0
      %1777 = vmatpush1.msra.mxu0 0.0
      %1778 = vmatprep.subr.mxu0 0.0
      %1779 = vmatpush1.msra.mxu0 0.0
      %1780 = vmatprep.mubr.f32.mxu0 0.0
      %1781 = vmatmul.mubr.f32.gmra.mrb[0].mxu0 %v1400
      %v1782 = vpop.f32.mrb[0].mxu0
      %v1783 = vadd.f32 0.0, %v1782
      %v1784 = vpop.f32.mrb[0].mxu0
      %1785 = vdwg.mxu0
      %v1786 = vrcp.pop %v1715
      %v1787 = vmul.f32 %v1783, %v1786
      %s1788 = scalar_lea.vmem [#allocation3], 16
      %1789 = vst [vmem:[%s1788] sm:$0xff] %v1787
      %s1790 = sadd.s32 0, 24
      %s1791 = scalar_lea.vmem [#allocation2], %s1790
      %v1792 = vld [vmem:[%s1791] sm:$0xff]
      %s1793 = sadd.s32 24, 32
      %s1794 = scalar_lea.vmem [#allocation2], %s1793
      %v1795 = vld [vmem:[%s1794] sm:$0xff]
      %s1796 = sadd.s32 24, 64
      %s1797 = scalar_lea.vmem [#allocation2], %s1796
      %v1798 = vld [vmem:[%s1797] sm:$0xff]
      %1799 = vxpose.xlu0.b32.start [1/16] %v1795, 128
      %1800 = vxpose.xlu0.b32.cont [2/16] 0.0, 128
      %1801 = vxpose.xlu0.b32.cont [3/16] 0.0, 128
      %1802 = vxpose.xlu0.b32.cont [4/16] 0.0, 128
      %1803 = vxpose.xlu0.b32.cont [5/16] 0.0, 128
      %1804 = vxpose.xlu0.b32.cont [6/16] 0.0, 128
      %1805 = vxpose.xlu0.b32.cont [7/16] 0.0, 128
      %1806 = vxpose.xlu0.b32.cont [8/16] 0.0, 128
      %1807 = vxpose.xlu0.b32.cont [9/16] 0.0, 128
      %1808 = vxpose.xlu0.b32.cont [10/16] 0.0, 128
      %1809 = vxpose.xlu0.b32.cont [11/16] 0.0, 128
      %1810 = vxpose.xlu0.b32.cont [12/16] 0.0, 128
      %1811 = vxpose.xlu0.b32.cont [13/16] 0.0, 128
      %1812 = vxpose.xlu0.b32.cont [14/16] 0.0, 128
      %1813 = vxpose.xlu0.b32.cont [15/16] 0.0, 128
      %1814 = vxpose.xlu0.b32.end [16/16] 0.0, 128
      %v1815 = vpop.trf.xlu0
      %v1816 = vpop.trf.xlu0
      %v1817 = vpop.trf.xlu0
      %v1818 = vpop.trf.xlu0
      %v1819 = vpop.trf.xlu0
      %v1820 = vpop.trf.xlu0
      %v1821 = vpop.trf.xlu0
      %v1822 = vpop.trf.xlu0
      %v1823 = vpop.trf.xlu0
      %v1824 = vpop.trf.xlu0
      %v1825 = vpop.trf.xlu0
      %v1826 = vpop.trf.xlu0
      %v1827 = vpop.trf.xlu0
      %v1828 = vpop.trf.xlu0
      %v1829 = vpop.trf.xlu0
      %v1830 = vpop.trf.xlu0
      %v1832 = vsel %vm637, %v1815, 0
      %v1835 = vsel %vm637, %v1816, 0
      %v1838 = vsel %vm637, %v1817, 0
      %v1841 = vsel %vm637, %v1818, 0
      %v1844 = vsel %vm637, %v1819, 0
      %v1847 = vsel %vm637, %v1820, 0
      %v1850 = vsel %vm637, %v1821, 0
      %v1853 = vsel %vm637, %v1822, 0
      %v1856 = vsel %vm637, %v1823, 0
      %v1859 = vsel %vm637, %v1824, 0
      %v1862 = vsel %vm637, %v1825, 0
      %v1865 = vsel %vm637, %v1826, 0
      %v1868 = vsel %vm637, %v1827, 0
      %v1871 = vsel %vm637, %v1828, 0
      %v1874 = vsel %vm637, %v1829, 0
      %v1877 = vsel %vm637, %v1830, 0
      %1879 = vmatprep.subr.mxu0 0.0
      %1880 = vmatpush1.msra.mxu0 %v1792
      %1881 = vmatprep.subr.mxu0 0.0
      %1882 = vmatpush1.msra.mxu0 0.0
      %1883 = vmatprep.subr.mxu0 0.0
      %1884 = vmatpush1.msra.mxu0 0.0
      %1885 = vmatprep.subr.mxu0 0.0
      %1886 = vmatpush1.msra.mxu0 0.0
      %1887 = vmatprep.subr.mxu0 0.0
      %1888 = vmatpush1.msra.mxu0 0.0
      %1889 = vmatprep.subr.mxu0 0.0
      %1890 = vmatpush1.msra.mxu0 0.0
      %1891 = vmatprep.subr.mxu0 0.0
      %1892 = vmatpush1.msra.mxu0 0.0
      %1893 = vmatprep.subr.mxu0 0.0
      %1894 = vmatpush1.msra.mxu0 0.0
      %1895 = vmatprep.subr.mxu0 0.0
      %1896 = vmatpush1.msra.mxu0 0.0
      %1897 = vmatprep.subr.mxu0 0.0
      %1898 = vmatpush1.msra.mxu0 0.0
      %1899 = vmatprep.subr.mxu0 0.0
      %1900 = vmatpush1.msra.mxu0 0.0
      %1901 = vmatprep.subr.mxu0 0.0
      %1902 = vmatpush1.msra.mxu0 0.0
      %1903 = vmatprep.subr.mxu0 0.0
      %1904 = vmatpush1.msra.mxu0 0.0
      %1905 = vmatprep.subr.mxu0 0.0
      %1906 = vmatpush1.msra.mxu0 0.0
      %1907 = vmatprep.subr.mxu0 0.0
      %1908 = vmatpush1.msra.mxu0 0.0
      %1909 = vmatprep.subr.mxu0 0.0
      %1910 = vmatpush1.msra.mxu0 0.0
      %1911 = vmatprep.subr.mxu0 0.0
      %1912 = vmatpush1.msra.mxu0 0.0
      %1913 = vmatprep.subr.mxu0 0.0
      %1914 = vmatpush1.msra.mxu0 0.0
      %1915 = vmatprep.subr.mxu0 0.0
      %1916 = vmatpush1.msra.mxu0 0.0
      %1917 = vmatprep.subr.mxu0 0.0
      %1918 = vmatpush1.msra.mxu0 0.0
      %1919 = vmatprep.subr.mxu0 0.0
      %1920 = vmatpush1.msra.mxu0 0.0
      %1921 = vmatprep.subr.mxu0 0.0
      %1922 = vmatpush1.msra.mxu0 0.0
      %1923 = vmatprep.subr.mxu0 0.0
      %1924 = vmatpush1.msra.mxu0 0.0
      %1925 = vmatprep.subr.mxu0 0.0
      %1926 = vmatpush1.msra.mxu0 0.0
      %1927 = vmatprep.subr.mxu0 0.0
      %1928 = vmatpush1.msra.mxu0 0.0
      %1929 = vmatprep.subr.mxu0 0.0
      %1930 = vmatpush1.msra.mxu0 0.0
      %1931 = vmatprep.subr.mxu0 0.0
      %1932 = vmatpush1.msra.mxu0 0.0
      %1933 = vmatprep.subr.mxu0 0.0
      %1934 = vmatpush1.msra.mxu0 0.0
      %1935 = vmatprep.subr.mxu0 0.0
      %1936 = vmatpush1.msra.mxu0 0.0
      %1937 = vmatprep.subr.mxu0 0.0
      %1938 = vmatpush1.msra.mxu0 0.0
      %1939 = vmatprep.subr.mxu0 0.0
      %1940 = vmatpush1.msra.mxu0 0.0
      %1941 = vmatprep.subr.mxu0 0.0
      %1942 = vmatpush1.msra.mxu0 0.0
      %1943 = vmatprep.mubr.f32.mxu0 0.0
      %1944 = vmatmul.mubr.f32.gmra.mrb[0].mxu0 %v1832
      %v1945 = vpop.f32.mrb[0].mxu0
      %v1946 = vadd.f32 %v580, %v1945
      %v1947 = vpop.f32.mrb[0].mxu0
      %1948 = vmatprep.mubr.f32.mxu0 0.0
      %1949 = vmatmul.mubr.f32.gmra.mrb[0].mxu0 %v1835
      %v1950 = vpop.f32.mrb[0].mxu0
      %v1951 = vadd.f32 %v581, %v1950
      %v1952 = vpop.f32.mrb[0].mxu0
      %1953 = vmatprep.mubr.f32.mxu0 0.0
      %1954 = vmatmul.mubr.f32.gmra.mrb[0].mxu0 %v1838
      %v1955 = vpop.f32.mrb[0].mxu0
      %v1956 = vadd.f32 %v582, %v1955
      %v1957 = vpop.f32.mrb[0].mxu0
      %1958 = vmatprep.mubr.f32.mxu0 0.0
      %1959 = vmatmul.mubr.f32.gmra.mrb[0].mxu0 %v1841
      %v1960 = vpop.f32.mrb[0].mxu0
      %v1961 = vadd.f32 %v583, %v1960
      %v1962 = vpop.f32.mrb[0].mxu0
      %1963 = vmatprep.mubr.f32.mxu0 0.0
      %1964 = vmatmul.mubr.f32.gmra.mrb[0].mxu0 %v1844
      %v1965 = vpop.f32.mrb[0].mxu0
      %v1966 = vadd.f32 %v584, %v1965
      %v1967 = vpop.f32.mrb[0].mxu0
      %1968 = vmatprep.mubr.f32.mxu0 0.0
      %1969 = vmatmul.mubr.f32.gmra.mrb[0].mxu0 %v1847
      %v1970 = vpop.f32.mrb[0].mxu0
      %v1971 = vadd.f32 %v585, %v1970
      %v1972 = vpop.f32.mrb[0].mxu0
      %1973 = vmatprep.mubr.f32.mxu0 0.0
      %1974 = vmatmul.mubr.f32.gmra.mrb[0].mxu0 %v1850
      %v1975 = vpop.f32.mrb[0].mxu0
      %v1976 = vadd.f32 %v586, %v1975
      %v1977 = vpop.f32.mrb[0].mxu0
      %1978 = vmatprep.mubr.f32.mxu0 0.0
      %1979 = vmatmul.mubr.f32.gmra.mrb[0].mxu0 %v1853
      %v1980 = vpop.f32.mrb[0].mxu0
      %v1981 = vadd.f32 %v587, %v1980
      %v1982 = vpop.f32.mrb[0].mxu0
      %1983 = vmatprep.mubr.f32.mxu0 0.0
      %1984 = vmatmul.mubr.f32.gmra.mrb[0].mxu0 %v1856
      %v1985 = vpop.f32.mrb[0].mxu0
      %v1986 = vadd.f32 %v588, %v1985
      %v1987 = vpop.f32.mrb[0].mxu0
      %1988 = vmatprep.mubr.f32.mxu0 0.0
      %1989 = vmatmul.mubr.f32.gmra.mrb[0].mxu0 %v1859
      %v1990 = vpop.f32.mrb[0].mxu0
      %v1991 = vadd.f32 %v589, %v1990
      %v1992 = vpop.f32.mrb[0].mxu0
      %1993 = vmatprep.mubr.f32.mxu0 0.0
      %1994 = vmatmul.mubr.f32.gmra.mrb[0].mxu0 %v1862
      %v1995 = vpop.f32.mrb[0].mxu0
      %v1996 = vadd.f32 %v590, %v1995
      %v1997 = vpop.f32.mrb[0].mxu0
      %1998 = vmatprep.mubr.f32.mxu0 0.0
      %1999 = vmatmul.mubr.f32.gmra.mrb[0].mxu0 %v1865
      %v2000 = vpop.f32.mrb[0].mxu0
      %v2001 = vadd.f32 %v591, %v2000
      %v2002 = vpop.f32.mrb[0].mxu0
      %2003 = vmatprep.mubr.f32.mxu0 0.0
      %2004 = vmatmul.mubr.f32.gmra.mrb[0].mxu0 %v1868
      %v2005 = vpop.f32.mrb[0].mxu0
      %v2006 = vadd.f32 %v592, %v2005
      %v2007 = vpop.f32.mrb[0].mxu0
      %2008 = vmatprep.mubr.f32.mxu0 0.0
      %2009 = vmatmul.mubr.f32.gmra.mrb[0].mxu0 %v1871
      %v2010 = vpop.f32.mrb[0].mxu0
      %v2011 = vadd.f32 %v593, %v2010
      %v2012 = vpop.f32.mrb[0].mxu0
      %2013 = vmatprep.mubr.f32.mxu0 0.0
      %2014 = vmatmul.mubr.f32.gmra.mrb[0].mxu0 %v1874
      %v2015 = vpop.f32.mrb[0].mxu0
      %v2016 = vadd.f32 %v594, %v2015
      %v2017 = vpop.f32.mrb[0].mxu0
      %2018 = vmatprep.mubr.f32.mxu0 0.0
      %2019 = vmatmul.mubr.f32.gmra.mrb[0].mxu0 %v1877
      %v2020 = vpop.f32.mrb[0].mxu0
      %v2021 = vadd.f32 %v595, %v2020
      %v2022 = vpop.f32.mrb[0].mxu0
      %2023 = vdwg.mxu0
      %v2024 = vmax.f32 %v1946, %v1966
      %v2025 = vmax.f32 %v1951, %v1971
      %v2026 = vmax.f32 %v1956, %v1976
      %v2027 = vmax.f32 %v1961, %v1981
      %v2028 = vmax.f32 %v2024, %v1986
      %v2029 = vmax.f32 %v2025, %v1991
      %v2030 = vmax.f32 %v2026, %v1996
      %v2031 = vmax.f32 %v2027, %v2001
      %v2032 = vmax.f32 %v2028, %v2006
      %v2033 = vmax.f32 %v2029, %v2011
      %v2034 = vmax.f32 %v2030, %v2016
      %v2035 = vmax.f32 %v2031, %v2021
      %v2036 = vmax.f32 %v2032, %v2033
      %v2037 = vmax.f32 %v2034, %v2035
      %v2038 = vmax.f32 %v2036, %v2037
      %v2039 = vrot.slane %v2038, 4
      %v2040 = vmax.f32 %v2038, %v2039
      %v2041 = vrot.slane %v2040, 2
      %v2042 = vmax.f32 %v2040, %v2041
      %v2043 = vrot.slane %v2042, 1
      %v2044 = vmax.f32 %v2042, %v2043
      %v2045 = vsub.f32 %v1946, %v2044
      %v2046 = vsub.f32 %v1951, %v2044
      %v2047 = vsub.f32 %v1956, %v2044
      %v2048 = vsub.f32 %v1961, %v2044
      %v2049 = vsub.f32 %v1966, %v2044
      %v2050 = vsub.f32 %v1971, %v2044
      %v2051 = vsub.f32 %v1976, %v2044
      %v2052 = vsub.f32 %v1981, %v2044
      %v2053 = vsub.f32 %v1986, %v2044
      %v2054 = vsub.f32 %v1991, %v2044
      %v2055 = vsub.f32 %v1996, %v2044
      %v2056 = vsub.f32 %v2001, %v2044
      %v2057 = vsub.f32 %v2006, %v2044
      %v2058 = vsub.f32 %v2011, %v2044
      %v2059 = vsub.f32 %v2016, %v2044
      %v2060 = vsub.f32 %v2021, %v2044
      %v2061 = vmul.f32 %v2045, 1.442695
      %v2062 = vpow.pop %v2061
      %v2063 = vmul.f32 %v2046, 1.442695
      %v2064 = vpow.pop %v2063
      %v2065 = vmul.f32 %v2047, 1.442695
      %v2066 = vpow.pop %v2065
      %v2067 = vmul.f32 %v2048, 1.442695
      %v2068 = vpow.pop %v2067
      %v2069 = vmul.f32 %v2049, 1.442695
      %v2070 = vpow.pop %v2069
      %v2071 = vmul.f32 %v2050, 1.442695
      %v2072 = vpow.pop %v2071
      %v2073 = vmul.f32 %v2051, 1.442695
      %v2074 = vpow.pop %v2073
      %v2075 = vmul.f32 %v2052, 1.442695
      %v2076 = vpow.pop %v2075
      %v2077 = vmul.f32 %v2053, 1.442695
      %v2078 = vpow.pop %v2077
      %v2079 = vmul.f32 %v2054, 1.442695
      %v2080 = vpow.pop %v2079
      %v2081 = vmul.f32 %v2055, 1.442695
      %v2082 = vpow.pop %v2081
      %v2083 = vmul.f32 %v2056, 1.442695
      %v2084 = vpow.pop %v2083
      %v2085 = vmul.f32 %v2057, 1.442695
      %v2086 = vpow.pop %v2085
      %v2087 = vmul.f32 %v2058, 1.442695
      %v2088 = vpow.pop %v2087
      %v2089 = vmul.f32 %v2059, 1.442695
      %v2090 = vpow.pop %v2089
      %v2091 = vmul.f32 %v2060, 1.442695
      %v2092 = vpow.pop %v2091
      %v2093 = vadd.f32 %v2062, %v2064
      %v2094 = vadd.f32 %v2093, %v2066
      %v2095 = vadd.f32 %v2094, %v2068
      %v2096 = vadd.f32 %v2095, %v2070
      %v2097 = vadd.f32 %v2096, %v2072
      %v2098 = vadd.f32 %v2097, %v2074
      %v2099 = vadd.f32 %v2098, %v2076
      %v2100 = vadd.f32 %v2099, %v2078
      %v2101 = vadd.f32 %v2100, %v2080
      %v2102 = vadd.f32 %v2101, %v2082
      %v2103 = vadd.f32 %v2102, %v2084
      %v2104 = vadd.f32 %v2103, %v2086
      %v2105 = vadd.f32 %v2104, %v2088
      %v2106 = vadd.f32 %v2105, %v2090
      %v2107 = vadd.f32 %v2106, %v2092
      %v2108 = vrot.slane %v2107, 4
      %v2109 = vadd.f32 %v2107, %v2108
      %v2110 = vrot.slane %v2109, 2
      %v2111 = vadd.f32 %v2109, %v2110
      %v2112 = vrot.slane %v2111, 1
      %v2113 = vadd.f32 %v2111, %v2112
      %2114 = vmatprep.subr.mxu0 0.0
      %2115 = vmatpush1.msra.mxu0 %v2062
      %2116 = vmatprep.subr.mxu0 0.0
      %2117 = vmatpush1.msra.mxu0 %v2064
      %2118 = vmatprep.subr.mxu0 0.0
      %2119 = vmatpush1.msra.mxu0 %v2066
      %2120 = vmatprep.subr.mxu0 0.0
      %2121 = vmatpush1.msra.mxu0 %v2068
      %2122 = vmatprep.subr.mxu0 0.0
      %2123 = vmatpush1.msra.mxu0 %v2070
      %2124 = vmatprep.subr.mxu0 0.0
      %2125 = vmatpush1.msra.mxu0 %v2072
      %2126 = vmatprep.subr.mxu0 0.0
      %2127 = vmatpush1.msra.mxu0 %v2074
      %2128 = vmatprep.subr.mxu0 0.0
      %2129 = vmatpush1.msra.mxu0 %v2076
      %2130 = vmatprep.subr.mxu0 0.0
      %2131 = vmatpush1.msra.mxu0 %v2078
      %2132 = vmatprep.subr.mxu0 0.0
      %2133 = vmatpush1.msra.mxu0 %v2080
      %2134 = vmatprep.subr.mxu0 0.0
      %2135 = vmatpush1.msra.mxu0 %v2082
      %2136 = vmatprep.subr.mxu0 0.0
      %2137 = vmatpush1.msra.mxu0 %v2084
      %2138 = vmatprep.subr.mxu0 0.0
      %2139 = vmatpush1.msra.mxu0 %v2086
      %2140 = vmatprep.subr.mxu0 0.0
      %2141 = vmatpush1.msra.mxu0 %v2088
      %2142 = vmatprep.subr.mxu0 0.0
      %2143 = vmatpush1.msra.mxu0 %v2090
      %2144 = vmatprep.subr.mxu0 0.0
      %2145 = vmatpush1.msra.mxu0 %v2092
      %2146 = vmatprep.subr.mxu0 0.0
      %2147 = vmatpush1.msra.mxu0 0.0
      %2148 = vmatprep.subr.mxu0 0.0
      %2149 = vmatpush1.msra.mxu0 0.0
      %2150 = vmatprep.subr.mxu0 0.0
      %2151 = vmatpush1.msra.mxu0 0.0
      %2152 = vmatprep.subr.mxu0 0.0
      %2153 = vmatpush1.msra.mxu0 0.0
      %2154 = vmatprep.subr.mxu0 0.0
      %2155 = vmatpush1.msra.mxu0 0.0
      %2156 = vmatprep.subr.mxu0 0.0
      %2157 = vmatpush1.msra.mxu0 0.0
      %2158 = vmatprep.subr.mxu0 0.0
      %2159 = vmatpush1.msra.mxu0 0.0
      %2160 = vmatprep.subr.mxu0 0.0
      %2161 = vmatpush1.msra.mxu0 0.0
      %2162 = vmatprep.subr.mxu0 0.0
      %2163 = vmatpush1.msra.mxu0 0.0
      %2164 = vmatprep.subr.mxu0 0.0
      %2165 = vmatpush1.msra.mxu0 0.0
      %2166 = vmatprep.subr.mxu0 0.0
      %2167 = vmatpush1.msra.mxu0 0.0
      %2168 = vmatprep.subr.mxu0 0.0
      %2169 = vmatpush1.msra.mxu0 0.0
      %2170 = vmatprep.subr.mxu0 0.0
      %2171 = vmatpush1.msra.mxu0 0.0
      %2172 = vmatprep.subr.mxu0 0.0
      %2173 = vmatpush1.msra.mxu0 0.0
      %2174 = vmatprep.subr.mxu0 0.0
      %2175 = vmatpush1.msra.mxu0 0.0
      %2176 = vmatprep.subr.mxu0 0.0
      %2177 = vmatpush1.msra.mxu0 0.0
      %2178 = vmatprep.mubr.f32.mxu0 0.0
      %2179 = vmatmul.mubr.f32.gmra.mrb[0].mxu0 %v1798
      %v2180 = vpop.f32.mrb[0].mxu0
      %v2181 = vadd.f32 0.0, %v2180
      %v2182 = vpop.f32.mrb[0].mxu0
      %2183 = vdwg.mxu0
      %v2184 = vrcp.pop %v2113
      %v2185 = vmul.f32 %v2181, %v2184
      %s2186 = scalar_lea.vmem [#allocation3], 24
      %2187 = vst [vmem:[%s2186] sm:$0xff] %v2185
      %v2188 = vld [vmem:[#allocation3] sm:$0xff]
      %v2189 = vld [vmem:[#allocation3 + $0x8] sm:$0xff]
      %v2190 = vld [vmem:[#allocation3 + $0x10] sm:$0xff]
      %v2191 = vld [vmem:[#allocation3 + $0x18] sm:$0xff]
      %v2192 = vld [vmem:[%s2] sm:$0xff]
      %v2193 = vld [vmem:[%s2 + $0x8] sm:$0xff]
      %v2194 = vld [vmem:[%s2 + $0x10] sm:$0xff]
      %v2195 = vld [vmem:[%s2 + $0x18] sm:$0xff]
      %v2196 = vld [vmem:[%s4] sm:$0x1]
      %v2198 = vlaneseq
      %v2199 = vshrl.u32 %v2198, 7
      %v2200 = vsub.s32 0, %v2199
      %v2201 = vrot.slane %v2196, %v2200
      %2203 = vxpose.xlu0.b32.start [1/16] %v2188, 128
      %2204 = vxpose.xlu0.b32.cont [2/16] %v2189, 128
      %2205 = vxpose.xlu0.b32.cont [3/16] %v2190, 128
      %2206 = vxpose.xlu0.b32.cont [4/16] %v2191, 128
      %2207 = vxpose.xlu0.b32.cont [5/16] 0.0, 128
      %2208 = vxpose.xlu0.b32.cont [6/16] 0.0, 128
      %2209 = vxpose.xlu0.b32.cont [7/16] 0.0, 128
      %2210 = vxpose.xlu0.b32.cont [8/16] 0.0, 128
      %2211 = vxpose.xlu0.b32.cont [9/16] 0.0, 128
      %2212 = vxpose.xlu0.b32.cont [10/16] 0.0, 128
      %2213 = vxpose.xlu0.b32.cont [11/16] 0.0, 128
      %2214 = vxpose.xlu0.b32.cont [12/16] 0.0, 128
      %2215 = vxpose.xlu0.b32.cont [13/16] 0.0, 128
      %2216 = vxpose.xlu0.b32.cont [14/16] 0.0, 128
      %2217 = vxpose.xlu0.b32.cont [15/16] 0.0, 128
      %2218 = vxpose.xlu0.b32.end [16/16] 0.0, 128
      %v2219 = vpop.trf.xlu0
      %v2220 = vpop.trf.xlu0
      %v2221 = vpop.trf.xlu0
      %v2222 = vpop.trf.xlu0
      %v2223 = vpop.trf.xlu0
      %v2224 = vpop.trf.xlu0
      %v2225 = vpop.trf.xlu0
      %v2226 = vpop.trf.xlu0
      %v2227 = vpop.trf.xlu0
      %v2228 = vpop.trf.xlu0
      %v2229 = vpop.trf.xlu0
      %v2230 = vpop.trf.xlu0
      %v2231 = vpop.trf.xlu0
      %v2232 = vpop.trf.xlu0
      %v2233 = vpop.trf.xlu0
      %v2234 = vpop.trf.xlu0
      %v2236 = vsel %vm325, %v2219, 0
      %v2239 = vsel %vm325, %v2220, 0
      %v2242 = vsel %vm325, %v2221, 0
      %v2245 = vsel %vm325, %v2222, 0
      %v2248 = vsel %vm325, %v2223, 0
      %v2251 = vsel %vm325, %v2224, 0
      %v2254 = vsel %vm325, %v2225, 0
      %v2257 = vsel %vm325, %v2226, 0
      %v2260 = vsel %vm325, %v2227, 0
      %v2263 = vsel %vm325, %v2228, 0
      %v2266 = vsel %vm325, %v2229, 0
      %v2269 = vsel %vm325, %v2230, 0
      %v2272 = vsel %vm325, %v2231, 0
      %v2275 = vsel %vm325, %v2232, 0
      %v2278 = vsel %vm325, %v2233, 0
      %v2281 = vsel %vm325, %v2234, 0
      %2283 = vmatprep.subr.mxu0 0.0
      %2284 = vmatpush1.msra.mxu0 %v2192
      %2285 = vmatprep.subr.mxu0 0.0
      %2286 = vmatpush1.msra.mxu0 %v2193
      %2287 = vmatprep.subr.mxu0 0.0
      %2288 = vmatpush1.msra.mxu0 %v2194
      %2289 = vmatprep.subr.mxu0 0.0
      %2290 = vmatpush1.msra.mxu0 %v2195
      %2291 = vmatprep.subr.mxu0 0.0
      %2292 = vmatpush1.msra.mxu0 0.0
      %2293 = vmatprep.subr.mxu0 0.0
      %2294 = vmatpush1.msra.mxu0 0.0
      %2295 = vmatprep.subr.mxu0 0.0
      %2296 = vmatpush1.msra.mxu0 0.0
      %2297 = vmatprep.subr.mxu0 0.0
      %2298 = vmatpush1.msra.mxu0 0.0
      %2299 = vmatprep.subr.mxu0 0.0
      %2300 = vmatpush1.msra.mxu0 0.0
      %2301 = vmatprep.subr.mxu0 0.0
      %2302 = vmatpush1.msra.mxu0 0.0
      %2303 = vmatprep.subr.mxu0 0.0
      %2304 = vmatpush1.msra.mxu0 0.0
      %2305 = vmatprep.subr.mxu0 0.0
      %2306 = vmatpush1.msra.mxu0 0.0
      %2307 = vmatprep.subr.mxu0 0.0
      %2308 = vmatpush1.msra.mxu0 0.0
      %2309 = vmatprep.subr.mxu0 0.0
      %2310 = vmatpush1.msra.mxu0 0.0
      %2311 = vmatprep.subr.mxu0 0.0
      %2312 = vmatpush1.msra.mxu0 0.0
      %2313 = vmatprep.subr.mxu0 0.0
      %2314 = vmatpush1.msra.mxu0 0.0
      %2315 = vmatprep.subr.mxu0 0.0
      %2316 = vmatpush1.msra.mxu0 0.0
      %2317 = vmatprep.subr.mxu0 0.0
      %2318 = vmatpush1.msra.mxu0 0.0
      %2319 = vmatprep.subr.mxu0 0.0
      %2320 = vmatpush1.msra.mxu0 0.0
      %2321 = vmatprep.subr.mxu0 0.0
      %2322 = vmatpush1.msra.mxu0 0.0
      %2323 = vmatprep.subr.mxu0 0.0
      %2324 = vmatpush1.msra.mxu0 0.0
      %2325 = vmatprep.subr.mxu0 0.0
      %2326 = vmatpush1.msra.mxu0 0.0
      %2327 = vmatprep.subr.mxu0 0.0
      %2328 = vmatpush1.msra.mxu0 0.0
      %2329 = vmatprep.subr.mxu0 0.0
      %2330 = vmatpush1.msra.mxu0 0.0
      %2331 = vmatprep.subr.mxu0 0.0
      %2332 = vmatpush1.msra.mxu0 0.0
      %2333 = vmatprep.subr.mxu0 0.0
      %2334 = vmatpush1.msra.mxu0 0.0
      %2335 = vmatprep.subr.mxu0 0.0
      %2336 = vmatpush1.msra.mxu0 0.0
      %2337 = vmatprep.subr.mxu0 0.0
      %2338 = vmatpush1.msra.mxu0 0.0
      %2339 = vmatprep.subr.mxu0 0.0
      %2340 = vmatpush1.msra.mxu0 0.0
      %2341 = vmatprep.subr.mxu0 0.0
      %2342 = vmatpush1.msra.mxu0 0.0
      %2343 = vmatprep.subr.mxu0 0.0
      %2344 = vmatpush1.msra.mxu0 0.0
      %2345 = vmatprep.subr.mxu0 0.0
      %2346 = vmatpush1.msra.mxu0 0.0
      %2347 = vmatprep.mubr.f32.mxu0 0.0
      %2348 = vmatmul.mubr.f32.gmra.mrb[0].mxu0 %v2236
      %v2349 = vpop.f32.mrb[0].mxu0
      %v2350 = vadd.f32 %v2201, %v2349
      %v2351 = vpop.f32.mrb[0].mxu0
      %2352 = vmatprep.mubr.f32.mxu0 0.0
      %2353 = vmatmul.mubr.f32.gmra.mrb[0].mxu0 %v2239
      %v2354 = vpop.f32.mrb[0].mxu0
      %v2355 = vadd.f32 %v2201, %v2354
      %v2356 = vpop.f32.mrb[0].mxu0
      %2357 = vmatprep.mubr.f32.mxu0 0.0
      %2358 = vmatmul.mubr.f32.gmra.mrb[0].mxu0 %v2242
      %v2359 = vpop.f32.mrb[0].mxu0
      %v2360 = vadd.f32 %v2201, %v2359
      %v2361 = vpop.f32.mrb[0].mxu0
      %2362 = vmatprep.mubr.f32.mxu0 0.0
      %2363 = vmatmul.mubr.f32.gmra.mrb[0].mxu0 %v2245
      %v2364 = vpop.f32.mrb[0].mxu0
      %v2365 = vadd.f32 %v2201, %v2364
      %v2366 = vpop.f32.mrb[0].mxu0
      %2367 = vmatprep.mubr.f32.mxu0 0.0
      %2368 = vmatmul.mubr.f32.gmra.mrb[0].mxu0 %v2248
      %v2369 = vpop.f32.mrb[0].mxu0
      %v2370 = vadd.f32 %v2201, %v2369
      %v2371 = vpop.f32.mrb[0].mxu0
      %2372 = vmatprep.mubr.f32.mxu0 0.0
      %2373 = vmatmul.mubr.f32.gmra.mrb[0].mxu0 %v2251
      %v2374 = vpop.f32.mrb[0].mxu0
      %v2375 = vadd.f32 %v2201, %v2374
      %v2376 = vpop.f32.mrb[0].mxu0
      %2377 = vmatprep.mubr.f32.mxu0 0.0
      %2378 = vmatmul.mubr.f32.gmra.mrb[0].mxu0 %v2254
      %v2379 = vpop.f32.mrb[0].mxu0
      %v2380 = vadd.f32 %v2201, %v2379
      %v2381 = vpop.f32.mrb[0].mxu0
      %2382 = vmatprep.mubr.f32.mxu0 0.0
      %2383 = vmatmul.mubr.f32.gmra.mrb[0].mxu0 %v2257
      %v2384 = vpop.f32.mrb[0].mxu0
      %v2385 = vadd.f32 %v2201, %v2384
      %v2386 = vpop.f32.mrb[0].mxu0
      %2387 = vmatprep.mubr.f32.mxu0 0.0
      %2388 = vmatmul.mubr.f32.gmra.mrb[0].mxu0 %v2260
      %v2389 = vpop.f32.mrb[0].mxu0
      %v2390 = vadd.f32 %v2201, %v2389
      %v2391 = vpop.f32.mrb[0].mxu0
      %2392 = vmatprep.mubr.f32.mxu0 0.0
      %2393 = vmatmul.mubr.f32.gmra.mrb[0].mxu0 %v2263
      %v2394 = vpop.f32.mrb[0].mxu0
      %v2395 = vadd.f32 %v2201, %v2394
      %v2396 = vpop.f32.mrb[0].mxu0
      %2397 = vmatprep.mubr.f32.mxu0 0.0
      %2398 = vmatmul.mubr.f32.gmra.mrb[0].mxu0 %v2266
      %v2399 = vpop.f32.mrb[0].mxu0
      %v2400 = vadd.f32 %v2201, %v2399
      %v2401 = vpop.f32.mrb[0].mxu0
      %2402 = vmatprep.mubr.f32.mxu0 0.0
      %2403 = vmatmul.mubr.f32.gmra.mrb[0].mxu0 %v2269
      %v2404 = vpop.f32.mrb[0].mxu0
      %v2405 = vadd.f32 %v2201, %v2404
      %v2406 = vpop.f32.mrb[0].mxu0
      %2407 = vmatprep.mubr.f32.mxu0 0.0
      %2408 = vmatmul.mubr.f32.gmra.mrb[0].mxu0 %v2272
      %v2409 = vpop.f32.mrb[0].mxu0
      %v2410 = vadd.f32 %v2201, %v2409
      %v2411 = vpop.f32.mrb[0].mxu0
      %2412 = vmatprep.mubr.f32.mxu0 0.0
      %2413 = vmatmul.mubr.f32.gmra.mrb[0].mxu0 %v2275
      %v2414 = vpop.f32.mrb[0].mxu0
      %v2415 = vadd.f32 %v2201, %v2414
      %v2416 = vpop.f32.mrb[0].mxu0
      %2417 = vmatprep.mubr.f32.mxu0 0.0
      %2418 = vmatmul.mubr.f32.gmra.mrb[0].mxu0 %v2278
      %v2419 = vpop.f32.mrb[0].mxu0
      %v2420 = vadd.f32 %v2201, %v2419
      %v2421 = vpop.f32.mrb[0].mxu0
      %2422 = vmatprep.mubr.f32.mxu0 0.0
      %2423 = vmatmul.mubr.f32.gmra.mrb[0].mxu0 %v2281
      %v2424 = vpop.f32.mrb[0].mxu0
      %v2425 = vadd.f32 %v2201, %v2424
      %v2426 = vpop.f32.mrb[0].mxu0
      %2427 = vdwg.mxu0
      %2428 = vst.msk [vmem:[%s224] sm:$0xff] %vm325, %v2350
      %2429 = vst.msk [vmem:[%s224 + $0x8] sm:$0xff] %vm325, %v2355
      %2430 = vst.msk [vmem:[%s224 + $0x10] sm:$0xff] %vm325, %v2360
      %2431 = vst.msk [vmem:[%s224 + $0x18] sm:$0xff] %vm325, %v2365
      %2432 = vst.msk [vmem:[%s224 + $0x20] sm:$0xff] %vm325, %v2370
      %2433 = vst.msk [vmem:[%s224 + $0x28] sm:$0xff] %vm325, %v2375
      %2434 = vst.msk [vmem:[%s224 + $0x30] sm:$0xff] %vm325, %v2380
      %2435 = vst.msk [vmem:[%s224 + $0x38] sm:$0xff] %vm325, %v2385
      %2436 = vst.msk [vmem:[%s224 + $0x40] sm:$0xff] %vm325, %v2390
      %2437 = vst.msk [vmem:[%s224 + $0x48] sm:$0xff] %vm325, %v2395
      %2438 = vst.msk [vmem:[%s224 + $0x50] sm:$0xff] %vm325, %v2400
      %2439 = vst.msk [vmem:[%s224 + $0x58] sm:$0xff] %vm325, %v2405
      %2440 = vst.msk [vmem:[%s224 + $0x60] sm:$0xff] %vm325, %v2410
      %2441 = vst.msk [vmem:[%s224 + $0x68] sm:$0xff] %vm325, %v2415
      %2442 = vst.msk [vmem:[%s224 + $0x70] sm:$0xff] %vm325, %v2420
      %2443 = vst.msk [vmem:[%s224 + $0x78] sm:$0xff] %vm325, %v2425
      %p2444 = scmp.lt.s32.totalorder %s16, 1
      %s2445 = scalar_select %p2444, %s16, 1
      %s2446 = smul.addr %s2445, 16
      %s2447 = smul.addr %s2446, 8
      %s2448 = scalar_lea.vmem %s5, %s2447
      // Predicated region
      $region41: #{tpu_custom_call.1} parent=39 // pred_check
        %p2449 = pneg %p144
      $region42: #{tpu_custom_call.1} parent=39 // pred_check_branch
        %2451 = sbr.rel (%p2449) target = $region44
      $region43: #{tpu_custom_call.1} parent=39 // pred_region
        _
      $region44: #{tpu_custom_call.1} parent=39 // pred_fallthru
        _
    $region40: #{tpu_custom_call.1} parent=5 // pred_fallthru
      _
    %p2452 = scmp.le.s32.totalorder 2, %s11
    // Predicated region
    $region45: #{tpu_custom_call.1} parent=5 // pred_check
      %p2453 = pneg %p2452
    $region46: #{tpu_custom_call.1} parent=5 // pred_check_branch
      %2455 = sbr.rel (%p2453) target = $region48
    $region47: #{tpu_custom_call.1} parent=5 // pred_region
      %s2456 = ssub.s32 %s11, 2
      // Predicated region
      $region49: #{tpu_custom_call.1} parent=47 // pred_check
        %p2457 = pneg %p150
      $region50: #{tpu_custom_call.1} parent=47 // pred_check_branch
        %2459 = sbr.rel (%p2457) target = $region52
      $region51: #{tpu_custom_call.1} parent=47 // pred_region
        %p2460 = scmp.lt.s32.totalorder %s17, 1
        %s2461 = scalar_select %p2460, %s17, 1
        %s2462 = smul.addr %s2461, 16
        %s2463 = smul.addr %s2462, 8
        %s2464 = scalar_lea.vmem %s5, %s2463
      $region52: #{tpu_custom_call.1} parent=47 // pred_fallthru
        _
    $region48: #{tpu_custom_call.1} parent=5 // pred_fallthru
      _
  $region6: #{tpu_custom_call.1} parent=0 // loop_footer
    %s15 = sadd.s32 1, %s11
  $region7: #{tpu_custom_call.1} parent=0 // loop_footer_branch
    %10 = sbr.rel target = $region3
  $region8: #{tpu_custom_call.1} parent=0 // loop_exit
    _

</llo_original>
